<compile_context>
chip_gen: v7x
topology: tpu7x:2x2x1
jax: 0.10.0
libtpu: 0.0.40
codegen_flags: <defaults>
</compile_context>

<pallas_src>
import functools

import jax
import jax.numpy as jnp
from jax.experimental import pallas as pl
from jax.experimental.pallas import tpu as pltpu


def _round_up(x, m):
    return (x + m - 1) // m * m


# ------------------------------ fused kernel --------------------------------

def _lcmvae_fused_kernel(
    # activations (blocked over the batch grid axis)
    img_ref, cap_ref, eps_ref,
    # frozen image-caption encoder
    img_w_ref, img_b_ref, cap_w_ref, cap_b_ref,
    # VAE encoder: first weight split into image/caption row blocks,
    # second weight split into mu / log_sigma halves (no concat, no slicing)
    enc_w1i_ref, enc_w1c_ref, enc_b1_ref,
    enc_wmu_ref, enc_bmu_ref, enc_wls_ref, enc_bls_ref,
    # VAE decoder
    dec_w1_ref, dec_b1_ref, dec_w2_ref, dec_b2_ref,
    # latent reconstructor
    lr_w1_ref, lr_b1_ref, lr_w2_ref, lr_b2_ref,
    # outputs
    recon_ref, small_ref,
    *, latent, embed_dim, slab_width, use_latent_regularizer):
    f32 = jnp.float32
    relu = lambda v: jnp.maximum(v, 0.0)

    # --- frozen ImageCaptionEncoder ---
    img_emb = (jnp.dot(img_ref[...], img_w_ref[...], preferred_element_type=f32)
               + img_b_ref[...])
    cap_pooled = jnp.mean(cap_ref[...], axis=1)                       # [BM, CAP_FEAT]
    cap_emb = (jnp.dot(cap_pooled, cap_w_ref[...], preferred_element_type=f32)
               + cap_b_ref[...])
    # language embedding == last embed_dim cols of [img_emb | cap_emb] == cap_emb
    lat_tgt = cap_emb

    # --- VAE encoder (concat avoided by splitting enc_w1) ---
    h = relu(jnp.dot(img_emb, enc_w1i_ref[...], preferred_element_type=f32)
             + jnp.dot(cap_emb, enc_w1c_ref[...], preferred_element_type=f32)
             + enc_b1_ref[...])
    mu = jnp.dot(h, enc_wmu_ref[...], preferred_element_type=f32) + enc_bmu_ref[...]
    log_sigma = jnp.dot(h, enc_wls_ref[...], preferred_element_type=f32) + enc_bls_ref[...]

    # --- reparameterization (EUP exp, co-issued with MXU work) ---
    z = mu + jnp.exp(log_sigma) * eps_ref[...]

    # --- VAE decoder, sigmoid output, lane-dense store ---
    # TODO(synk): at real MAE scale (img_flat ~150K) tile dec_w2 over its
    # output-N axis with a grid + accumulator so weight tiles fit v7x's VMEM.
    hd = relu(jnp.dot(z, dec_w1_ref[...], preferred_element_type=f32) + dec_b1_ref[...])
    recon = jax.nn.sigmoid(jnp.dot(hd, dec_w2_ref[...], preferred_element_type=f32)
                           + dec_b2_ref[...])
    recon_ref[...] = recon.astype(recon_ref.dtype)

    # --- latent reconstructor ---
    if use_latent_regularizer:
        hl = relu(jnp.dot(z, lr_w1_ref[...], preferred_element_type=f32) + lr_b1_ref[...])
        lat_rec = jnp.dot(hl, lr_w2_ref[...], preferred_element_type=f32) + lr_b2_ref[...]
    else:
        lat_rec = jnp.zeros((z.shape[0], embed_dim), f32)

    # --- small outputs co-located in one lane-dense [BM, slab_width] slab ---
    pieces = [mu, log_sigma, z, lat_rec, lat_tgt]
    used = 3 * latent + 2 * embed_dim
    if slab_width > used:
        pieces.append(jnp.zeros((mu.shape[0], slab_width - used), f32))
    small_ref[...] = jnp.concatenate(pieces, axis=-1).astype(small_ref.dtype)


# --------------------------- parameter helpers -------------------------------

def xavier_uniform(key, fan_in, fan_out):
    limit = (6.0 / (fan_in + fan_out)) ** 0.5
    return jax.random.uniform(key, (fan_in, fan_out), jnp.float32, -limit, limit)


def make_params(key, *, img_flat, im_embed, cap_feat, embed_dim, hidden, latent):
    ks = jax.random.split(key, 8)
    p = {}
    # Frozen image-caption encoder (synthetic, deterministic).
    p["img_w"] = xavier_uniform(ks[0], img_flat, im_embed)
    p["img_b"] = jnp.zeros((im_embed,), jnp.float32)
    p["cap_w"] = xavier_uniform(ks[1], cap_feat, embed_dim)
    p["cap_b"] = jnp.zeros((embed_dim,), jnp.float32)
    # VAE (xavier weights, bias = 0.01, matching _init_vae_weights).
    enc_in = im_embed + embed_dim
    p["enc_w1"] = xavier_uniform(ks[2], enc_in, hidden)
    p["enc_b1"] = jnp.full((hidden,), 0.01, jnp.float32)
    p["enc_w2"] = xavier_uniform(ks[3], hidden, 2 * latent)
    p["enc_b2"] = jnp.full((2 * latent,), 0.01, jnp.float32)
    p["dec_w1"] = xavier_uniform(ks[4], latent, hidden)
    p["dec_b1"] = jnp.full((hidden,), 0.01, jnp.float32)
    p["dec_w2"] = xavier_uniform(ks[5], hidden, img_flat)
    p["dec_b2"] = jnp.full((img_flat,), 0.01, jnp.float32)
    # Latent reconstructor.
    p["lr_w1"] = xavier_uniform(ks[6], latent, hidden)
    p["lr_b1"] = jnp.full((hidden,), 0.01, jnp.float32)
    p["lr_w2"] = xavier_uniform(ks[7], hidden, embed_dim)
    p["lr_b2"] = jnp.full((embed_dim,), 0.01, jnp.float32)
    return p


# ------------------------------ forward pass ---------------------------------

@functools.partial(jax.jit,
                   static_argnames=("embed_dim", "latent", "is_mae",
                                    "use_latent_regularizer"))
def lcmvae_forward(params, images, captions, eps, *, embed_dim, latent,
                   is_mae=False, use_latent_regularizer=True):
    """Mirrors LCMVAE.forward(images, captions) -> (vae_outputs, mask)."""
    del is_mae  # TODO(synk): MAE masking branch (is_mae=True) not modeled.
    B, C, H, W = images.shape
    img_flat_dim = C * H * W
    seq, cap_feat = captions.shape[1], captions.shape[2]

    # Frozen encoder (torch.no_grad): stop gradients through inputs AND its weights.
    images = jax.lax.stop_gradient(images)
    captions = jax.lax.stop_gradient(captions)
    frozen = {k: jax.lax.stop_gradient(params[k])
              for k in ("img_w", "img_b", "cap_w", "cap_b")}

    im_embed = params["img_w"].shape[1]

    # Host-side (one-time) weight splits so the kernel needs no concat/slicing.
    enc_w1i = params["enc_w1"][:im_embed]          # [im_embed, hidden]
    enc_w1c = params["enc_w1"][im_embed:]          # [embed_dim, hidden]
    enc_wmu = params["enc_w2"][:, :latent]
    enc_wls = params["enc_w2"][:, latent:]
    enc_bmu = params["enc_b2"][:latent]
    enc_bls = params["enc_b2"][latent:]

    # Pad batch to a sublane/MXU-friendly block; tile batch with a parallel grid.
    bm = min(128, _round_up(B, 8))
    b_pad = _round_up(B, bm)
    pad_b = b_pad - B

    img2d = jnp.pad(images.reshape(B, img_flat_dim), ((0, pad_b), (0, 0)))
    cap3d = jnp.pad(captions, ((0, pad_b), (0, 0), (0, 0)))
    eps2d = jnp.pad(eps, ((0, pad_b), (0, 0)))

    slab_width = _round_up(3 * latent + 2 * embed_dim, 128)

    row2 = lambda i: (i, 0)
    row3 = lambda i: (i, 0, 0)
    bc2 = lambda i: (0, 0)
    as_row = lambda b: b.reshape(1, -1)

    weights = [
        frozen["img_w"], as_row(frozen["img_b"]),
        frozen["cap_w"], as_row(frozen["cap_b"]),
        enc_w1i, enc_w1c, as_row(params["enc_b1"]),
        enc_wmu, as_row(enc_bmu), enc_wls, as_row(enc_bls),
        params["dec_w1"], as_row(params["dec_b1"]),
        params["dec_w2"], as_row(params["dec_b2"]),
        params["lr_w1"], as_row(params["lr_b1"]),
        params["lr_w2"], as_row(params["lr_b2"]),
    ]

    kernel = functools.partial(
        _lcmvae_fused_kernel,
        latent=latent, embed_dim=embed_dim, slab_width=slab_width,
        use_latent_regularizer=use_latent_regularizer)

    recon_pad, small_pad = pl.pallas_call(
        kernel,
        out_shape=(jax.ShapeDtypeStruct((b_pad, img_flat_dim), jnp.float32),
                   jax.ShapeDtypeStruct((b_pad, slab_width), jnp.float32)),
        grid_spec=pltpu.PrefetchScalarGridSpec(
            num_scalar_prefetch=0,
            grid=(b_pad // bm,),
            in_specs=[pl.BlockSpec((bm, img_flat_dim), row2),
                      pl.BlockSpec((bm, seq, cap_feat), row3),
                      pl.BlockSpec((bm, latent), row2)]
                     + [pl.BlockSpec(w.shape, bc2) for w in weights],
            out_specs=[pl.BlockSpec((bm, img_flat_dim), row2),
                       pl.BlockSpec((bm, slab_width), row2)]),
        compiler_params=pltpu.CompilerParams(
            dimension_semantics=("parallel",)),
    )(img2d, cap3d, eps2d, *weights)

    # Unpack (cheap XLA slices of lane-dense kernel outputs).
    recon = recon_pad[:B].reshape(B, C, H, W)
    small = small_pad[:B]
    mu = small[:, :latent]
    log_sigma = small[:, latent:2 * latent]
    z = small[:, 2 * latent:3 * latent]

    vae_outputs = {
        "reconstruction": recon,
        "mu": mu,
        "log_sigma": log_sigma,
        "z": z,
    }
    if use_latent_regularizer:
        off = 3 * latent
        vae_outputs["latent_reconstruction"] = small[:, off:off + embed_dim]
        vae_outputs["latent_target"] = small[:, off + embed_dim:off + 2 * embed_dim]

    mask = None
    return vae_outputs, mask


# ----------------------------------- main ------------------------------------

if __name__ == "__main__":
    # Small shapes consistent with the module's forward contract.
    B, C, H, W = 2, 4, 16, 16
    SEQ, CAP_FEAT = 8, 16
    IM_EMBED, EMBED_DIM = 64, 32
    HIDDEN, LATENT = 64, 16

    key = jax.random.PRNGKey(0)
    k_img, k_cap, k_eps, k_par = jax.random.split(key, 4)

    images = jax.random.normal(k_img, (B, C, H, W), jnp.float32)
    captions = jax.random.normal(k_cap, (B, SEQ, CAP_FEAT), jnp.float32)
    eps = jax.random.normal(k_eps, (B, LATENT), jnp.float32)

    params = make_params(k_par, img_flat=C * H * W, im_embed=IM_EMBED,
                         cap_feat=CAP_FEAT, embed_dim=EMBED_DIM,
                         hidden=HIDDEN, latent=LATENT)

    vae_outputs, mask = lcmvae_forward(
        params, images, captions, eps,
        embed_dim=EMBED_DIM, latent=LATENT,
        is_mae=False, use_latent_regularizer=True)

    jax.block_until_ready(vae_outputs)

    assert vae_outputs["reconstruction"].shape == (B, C, H, W)
    assert vae_outputs["mu"].shape == (B, LATENT)
    assert vae_outputs["log_sigma"].shape == (B, LATENT)
    assert vae_outputs["z"].shape == (B, LATENT)
    assert vae_outputs["latent_reconstruction"].shape == (B, EMBED_DIM)
    assert vae_outputs["latent_target"].shape == (B, EMBED_DIM)
    assert mask is None
    assert bool(jnp.all(jnp.isfinite(vae_outputs["reconstruction"])))

    print("KERNEL_OK")
</pallas_src>

<mosaic_0001>
module attributes {stable_mosaic.version = 11 : i64} {
  func.func @_lcmvae_fused_kernel(%arg0: i32, %arg1: memref<8x1024xf32, #tpu.memory_space<vmem>>, %arg2: memref<8x8x16xf32, #tpu.memory_space<vmem>>, %arg3: memref<8x16xf32, #tpu.memory_space<vmem>>, %arg4: memref<1024x64xf32, #tpu.memory_space<vmem>>, %arg5: memref<1x64xf32, #tpu.memory_space<vmem>>, %arg6: memref<16x32xf32, #tpu.memory_space<vmem>>, %arg7: memref<1x32xf32, #tpu.memory_space<vmem>>, %arg8: memref<64x64xf32, #tpu.memory_space<vmem>>, %arg9: memref<32x64xf32, #tpu.memory_space<vmem>>, %arg10: memref<1x64xf32, #tpu.memory_space<vmem>>, %arg11: memref<64x16xf32, #tpu.memory_space<vmem>>, %arg12: memref<1x16xf32, #tpu.memory_space<vmem>>, %arg13: memref<64x16xf32, #tpu.memory_space<vmem>>, %arg14: memref<1x16xf32, #tpu.memory_space<vmem>>, %arg15: memref<16x64xf32, #tpu.memory_space<vmem>>, %arg16: memref<1x64xf32, #tpu.memory_space<vmem>>, %arg17: memref<64x1024xf32, #tpu.memory_space<vmem>>, %arg18: memref<1x1024xf32, #tpu.memory_space<vmem>>, %arg19: memref<16x64xf32, #tpu.memory_space<vmem>>, %arg20: memref<1x64xf32, #tpu.memory_space<vmem>>, %arg21: memref<64x32xf32, #tpu.memory_space<vmem>>, %arg22: memref<1x32xf32, #tpu.memory_space<vmem>>, %arg23: memref<8x1024xf32, #tpu.memory_space<vmem>>, %arg24: memref<8x128xf32, #tpu.memory_space<vmem>>) attributes {dimension_semantics = [#tpu.dimension_semantics<parallel>], iteration_bounds = array<i64: 1>, scalar_prefetch = 0 : i64, scratch_operands = 0 : i64, tpu.core_type = #tpu.core_type<tc>, window_params = [{transform_indices = @transform_0, window_bounds = array<i64: 8, 1024>}, {transform_indices = @transform_1, window_bounds = array<i64: 8, 8, 16>}, {transform_indices = @transform_2, window_bounds = array<i64: 8, 16>}, {pipeline_mode = #tpu.pipeline_mode<synchronous>, transform_indices = @transform_3, window_bounds = array<i64: 1024, 64>}, {pipeline_mode = #tpu.pipeline_mode<synchronous>, transform_indices = @transform_4, window_bounds = array<i64: 1, 64>}, {pipeline_mode = #tpu.pipeline_mode<synchronous>, transform_indices = @transform_5, window_bounds = array<i64: 16, 32>}, {pipeline_mode = #tpu.pipeline_mode<synchronous>, transform_indices = @transform_6, window_bounds = array<i64: 1, 32>}, {pipeline_mode = #tpu.pipeline_mode<synchronous>, transform_indices = @transform_7, window_bounds = array<i64: 64, 64>}, {pipeline_mode = #tpu.pipeline_mode<synchronous>, transform_indices = @transform_8, window_bounds = array<i64: 32, 64>}, {pipeline_mode = #tpu.pipeline_mode<synchronous>, transform_indices = @transform_9, window_bounds = array<i64: 1, 64>}, {pipeline_mode = #tpu.pipeline_mode<synchronous>, transform_indices = @transform_10, window_bounds = array<i64: 64, 16>}, {pipeline_mode = #tpu.pipeline_mode<synchronous>, transform_indices = @transform_11, window_bounds = array<i64: 1, 16>}, {pipeline_mode = #tpu.pipeline_mode<synchronous>, transform_indices = @transform_12, window_bounds = array<i64: 64, 16>}, {pipeline_mode = #tpu.pipeline_mode<synchronous>, transform_indices = @transform_13, window_bounds = array<i64: 1, 16>}, {pipeline_mode = #tpu.pipeline_mode<synchronous>, transform_indices = @transform_14, window_bounds = array<i64: 16, 64>}, {pipeline_mode = #tpu.pipeline_mode<synchronous>, transform_indices = @transform_15, window_bounds = array<i64: 1, 64>}, {pipeline_mode = #tpu.pipeline_mode<synchronous>, transform_indices = @transform_16, window_bounds = array<i64: 64, 1024>}, {pipeline_mode = #tpu.pipeline_mode<synchronous>, transform_indices = @transform_17, window_bounds = array<i64: 1, 1024>}, {pipeline_mode = #tpu.pipeline_mode<synchronous>, transform_indices = @transform_18, window_bounds = array<i64: 16, 64>}, {pipeline_mode = #tpu.pipeline_mode<synchronous>, transform_indices = @transform_19, window_bounds = array<i64: 1, 64>}, {pipeline_mode = #tpu.pipeline_mode<synchronous>, transform_indices = @transform_20, window_bounds = array<i64: 64, 32>}, {pipeline_mode = #tpu.pipeline_mode<synchronous>, transform_indices = @transform_21, window_bounds = array<i64: 1, 32>}, {transform_indices = @transform_22, window_bounds = array<i64: 8, 1024>}, {transform_indices = @transform_23, window_bounds = array<i64: 8, 128>}]} {
    %c0 = arith.constant 0 : index
    %c0_0 = arith.constant 0 : index
    %0 = vector.load %arg1[%c0, %c0_0] : memref<8x1024xf32, #tpu.memory_space<vmem>>, vector<8x1024xf32>
    %c0_1 = arith.constant 0 : index
    %c0_2 = arith.constant 0 : index
    %1 = vector.load %arg4[%c0_1, %c0_2] : memref<1024x64xf32, #tpu.memory_space<vmem>>, vector<1024x64xf32>
    %cst = arith.constant dense<0.000000e+00> : vector<8x64xf32>
    %2 = tpu.matmul %0, %1, %cst {dimension_numbers = #tpu.dot_dimension_numbers<[1], [0], [0], [1], [0, 0, 1, 1], [], []>} : vector<8x1024xf32>, vector<1024x64xf32>, vector<8x64xf32> -> vector<8x64xf32>
    %c0_3 = arith.constant 0 : index
    %c0_4 = arith.constant 0 : index
    %3 = vector.load %arg5[%c0_3, %c0_4] : memref<1x64xf32, #tpu.memory_space<vmem>>, vector<1x64xf32>
    %4 = vector.broadcast %3 : vector<1x64xf32> to vector<8x64xf32>
    %5 = arith.addf %2, %4 : vector<8x64xf32>
    %c0_5 = arith.constant 0 : index
    %c0_6 = arith.constant 0 : index
    %c0_7 = arith.constant 0 : index
    %6 = vector.load %arg2[%c0_5, %c0_6, %c0_7] : memref<8x8x16xf32, #tpu.memory_space<vmem>>, vector<8x8x16xf32>
    %cst_8 = arith.constant dense<0.000000e+00> : vector<8x16xf32>
    %7 = vector.multi_reduction <add>, %6, %cst_8 [1] : vector<8x8x16xf32> to vector<8x16xf32>
    %cst_9 = arith.constant 8.000000e+00 : f32
    %8 = vector.broadcast %cst_9 : f32 to vector<8x16xf32>
    %9 = arith.divf %7, %8 : vector<8x16xf32>
    %c0_10 = arith.constant 0 : index
    %c0_11 = arith.constant 0 : index
    %10 = vector.load %arg6[%c0_10, %c0_11] : memref<16x32xf32, #tpu.memory_space<vmem>>, vector<16x32xf32>
    %cst_12 = arith.constant dense<0.000000e+00> : vector<8x32xf32>
    %11 = tpu.matmul %9, %10, %cst_12 {dimension_numbers = #tpu.dot_dimension_numbers<[1], [0], [0], [1], [0, 0, 1, 1], [], []>} : vector<8x16xf32>, vector<16x32xf32>, vector<8x32xf32> -> vector<8x32xf32>
    %c0_13 = arith.constant 0 : index
    %c0_14 = arith.constant 0 : index
    %12 = vector.load %arg7[%c0_13, %c0_14] : memref<1x32xf32, #tpu.memory_space<vmem>>, vector<1x32xf32>
    %13 = vector.broadcast %12 : vector<1x32xf32> to vector<8x32xf32>
    %14 = arith.addf %11, %13 : vector<8x32xf32>
    %c0_15 = arith.constant 0 : index
    %c0_16 = arith.constant 0 : index
    %15 = vector.load %arg8[%c0_15, %c0_16] : memref<64x64xf32, #tpu.memory_space<vmem>>, vector<64x64xf32>
    %cst_17 = arith.constant dense<0.000000e+00> : vector<8x64xf32>
    %16 = tpu.matmul %5, %15, %cst_17 {dimension_numbers = #tpu.dot_dimension_numbers<[1], [0], [0], [1], [0, 0, 1, 1], [], []>} : vector<8x64xf32>, vector<64x64xf32>, vector<8x64xf32> -> vector<8x64xf32>
    %c0_18 = arith.constant 0 : index
    %c0_19 = arith.constant 0 : index
    %17 = vector.load %arg9[%c0_18, %c0_19] : memref<32x64xf32, #tpu.memory_space<vmem>>, vector<32x64xf32>
    %cst_20 = arith.constant dense<0.000000e+00> : vector<8x64xf32>
    %18 = tpu.matmul %14, %17, %cst_20 {dimension_numbers = #tpu.dot_dimension_numbers<[1], [0], [0], [1], [0, 0, 1, 1], [], []>} : vector<8x32xf32>, vector<32x64xf32>, vector<8x64xf32> -> vector<8x64xf32>
    %19 = arith.addf %16, %18 : vector<8x64xf32>
    %c0_21 = arith.constant 0 : index
    %c0_22 = arith.constant 0 : index
    %20 = vector.load %arg10[%c0_21, %c0_22] : memref<1x64xf32, #tpu.memory_space<vmem>>, vector<1x64xf32>
    %21 = vector.broadcast %20 : vector<1x64xf32> to vector<8x64xf32>
    %22 = arith.addf %19, %21 : vector<8x64xf32>
    %cst_23 = arith.constant 0.000000e+00 : f32
    %23 = vector.broadcast %cst_23 : f32 to vector<8x64xf32>
    %24 = arith.maximumf %22, %23 : vector<8x64xf32>
    %c0_24 = arith.constant 0 : index
    %c0_25 = arith.constant 0 : index
    %25 = vector.load %arg11[%c0_24, %c0_25] : memref<64x16xf32, #tpu.memory_space<vmem>>, vector<64x16xf32>
    %cst_26 = arith.constant dense<0.000000e+00> : vector<8x16xf32>
    %26 = tpu.matmul %24, %25, %cst_26 {dimension_numbers = #tpu.dot_dimension_numbers<[1], [0], [0], [1], [0, 0, 1, 1], [], []>} : vector<8x64xf32>, vector<64x16xf32>, vector<8x16xf32> -> vector<8x16xf32>
    %c0_27 = arith.constant 0 : index
    %c0_28 = arith.constant 0 : index
    %27 = vector.load %arg12[%c0_27, %c0_28] : memref<1x16xf32, #tpu.memory_space<vmem>>, vector<1x16xf32>
    %28 = vector.broadcast %27 : vector<1x16xf32> to vector<8x16xf32>
    %29 = arith.addf %26, %28 : vector<8x16xf32>
    %c0_29 = arith.constant 0 : index
    %c0_30 = arith.constant 0 : index
    %30 = vector.load %arg13[%c0_29, %c0_30] : memref<64x16xf32, #tpu.memory_space<vmem>>, vector<64x16xf32>
    %cst_31 = arith.constant dense<0.000000e+00> : vector<8x16xf32>
    %31 = tpu.matmul %24, %30, %cst_31 {dimension_numbers = #tpu.dot_dimension_numbers<[1], [0], [0], [1], [0, 0, 1, 1], [], []>} : vector<8x64xf32>, vector<64x16xf32>, vector<8x16xf32> -> vector<8x16xf32>
    %c0_32 = arith.constant 0 : index
    %c0_33 = arith.constant 0 : index
    %32 = vector.load %arg14[%c0_32, %c0_33] : memref<1x16xf32, #tpu.memory_space<vmem>>, vector<1x16xf32>
    %33 = vector.broadcast %32 : vector<1x16xf32> to vector<8x16xf32>
    %34 = arith.addf %31, %33 : vector<8x16xf32>
    %35 = math.exp %34 : vector<8x16xf32>
    %c0_34 = arith.constant 0 : index
    %c0_35 = arith.constant 0 : index
    %36 = vector.load %arg3[%c0_34, %c0_35] : memref<8x16xf32, #tpu.memory_space<vmem>>, vector<8x16xf32>
    %37 = arith.mulf %35, %36 : vector<8x16xf32>
    %38 = arith.addf %29, %37 : vector<8x16xf32>
    %c0_36 = arith.constant 0 : index
    %c0_37 = arith.constant 0 : index
    %39 = vector.load %arg15[%c0_36, %c0_37] : memref<16x64xf32, #tpu.memory_space<vmem>>, vector<16x64xf32>
    %cst_38 = arith.constant dense<0.000000e+00> : vector<8x64xf32>
    %40 = tpu.matmul %38, %39, %cst_38 {dimension_numbers = #tpu.dot_dimension_numbers<[1], [0], [0], [1], [0, 0, 1, 1], [], []>} : vector<8x16xf32>, vector<16x64xf32>, vector<8x64xf32> -> vector<8x64xf32>
    %c0_39 = arith.constant 0 : index
    %c0_40 = arith.constant 0 : index
    %41 = vector.load %arg16[%c0_39, %c0_40] : memref<1x64xf32, #tpu.memory_space<vmem>>, vector<1x64xf32>
    %42 = vector.broadcast %41 : vector<1x64xf32> to vector<8x64xf32>
    %43 = arith.addf %40, %42 : vector<8x64xf32>
    %cst_41 = arith.constant 0.000000e+00 : f32
    %44 = vector.broadcast %cst_41 : f32 to vector<8x64xf32>
    %45 = arith.maximumf %43, %44 : vector<8x64xf32>
    %c0_42 = arith.constant 0 : index
    %c0_43 = arith.constant 0 : index
    %46 = vector.load %arg17[%c0_42, %c0_43] : memref<64x1024xf32, #tpu.memory_space<vmem>>, vector<64x1024xf32>
    %cst_44 = arith.constant dense<0.000000e+00> : vector<8x1024xf32>
    %47 = tpu.matmul %45, %46, %cst_44 {dimension_numbers = #tpu.dot_dimension_numbers<[1], [0], [0], [1], [0, 0, 1, 1], [], []>} : vector<8x64xf32>, vector<64x1024xf32>, vector<8x1024xf32> -> vector<8x1024xf32>
    %c0_45 = arith.constant 0 : index
    %c0_46 = arith.constant 0 : index
    %48 = vector.load %arg18[%c0_45, %c0_46] : memref<1x1024xf32, #tpu.memory_space<vmem>>, vector<1x1024xf32>
    %49 = vector.broadcast %48 : vector<1x1024xf32> to vector<8x1024xf32>
    %50 = arith.addf %47, %49 : vector<8x1024xf32>
    %51 = arith.negf %50 : vector<8x1024xf32>
    %52 = math.exp %51 : vector<8x1024xf32>
    %cst_47 = arith.constant 1.000000e+00 : f32
    %53 = vector.broadcast %cst_47 : f32 to vector<8x1024xf32>
    %54 = arith.addf %53, %52 : vector<8x1024xf32>
    %55 = arith.divf %53, %54 : vector<8x1024xf32>
    %c0_48 = arith.constant 0 : index
    %c0_49 = arith.constant 0 : index
    %56 = vector.load %arg23[%c0_48, %c0_49] : memref<8x1024xf32, #tpu.memory_space<vmem>>, vector<8x1024xf32>
    tpu.vector_store %arg23[%c0_48, %c0_49], %55 {strides = array<i32>} : memref<8x1024xf32, #tpu.memory_space<vmem>>, vector<8x1024xf32>,
    %c0_50 = arith.constant 0 : index
    %c0_51 = arith.constant 0 : index
    %57 = vector.load %arg19[%c0_50, %c0_51] : memref<16x64xf32, #tpu.memory_space<vmem>>, vector<16x64xf32>
    %cst_52 = arith.constant dense<0.000000e+00> : vector<8x64xf32>
    %58 = tpu.matmul %38, %57, %cst_52 {dimension_numbers = #tpu.dot_dimension_numbers<[1], [0], [0], [1], [0, 0, 1, 1], [], []>} : vector<8x16xf32>, vector<16x64xf32>, vector<8x64xf32> -> vector<8x64xf32>
    %c0_53 = arith.constant 0 : index
    %c0_54 = arith.constant 0 : index
    %59 = vector.load %arg20[%c0_53, %c0_54] : memref<1x64xf32, #tpu.memory_space<vmem>>, vector<1x64xf32>
    %60 = vector.broadcast %59 : vector<1x64xf32> to vector<8x64xf32>
    %61 = arith.addf %58, %60 : vector<8x64xf32>
    %cst_55 = arith.constant 0.000000e+00 : f32
    %62 = vector.broadcast %cst_55 : f32 to vector<8x64xf32>
    %63 = arith.maximumf %61, %62 : vector<8x64xf32>
    %c0_56 = arith.constant 0 : index
    %c0_57 = arith.constant 0 : index
    %64 = vector.load %arg21[%c0_56, %c0_57] : memref<64x32xf32, #tpu.memory_space<vmem>>, vector<64x32xf32>
    %cst_58 = arith.constant dense<0.000000e+00> : vector<8x32xf32>
    %65 = tpu.matmul %63, %64, %cst_58 {dimension_numbers = #tpu.dot_dimension_numbers<[1], [0], [0], [1], [0, 0, 1, 1], [], []>} : vector<8x64xf32>, vector<64x32xf32>, vector<8x32xf32> -> vector<8x32xf32>
    %c0_59 = arith.constant 0 : index
    %c0_60 = arith.constant 0 : index
    %66 = vector.load %arg22[%c0_59, %c0_60] : memref<1x32xf32, #tpu.memory_space<vmem>>, vector<1x32xf32>
    %67 = vector.broadcast %66 : vector<1x32xf32> to vector<8x32xf32>
    %68 = arith.addf %65, %67 : vector<8x32xf32>
    %cst_61 = arith.constant 0.000000e+00 : f32
    %69 = vector.broadcast %cst_61 : f32 to vector<8x16xf32>
    %70 = tpu.concatenate %29, %34, %38, %68, %14, %69 in 1 : vector<8x16xf32>, vector<8x16xf32>, vector<8x16xf32>, vector<8x32xf32>, vector<8x32xf32>, vector<8x16xf32> -> vector<8x128xf32>
    %c0_62 = arith.constant 0 : index
    %c0_63 = arith.constant 0 : index
    %71 = vector.load %arg24[%c0_62, %c0_63] : memref<8x128xf32, #tpu.memory_space<vmem>>, vector<8x128xf32>
    tpu.vector_store %arg24[%c0_62, %c0_63], %70 {strides = array<i32>} : memref<8x128xf32, #tpu.memory_space<vmem>>, vector<8x128xf32>,
    return
  }
  func.func @transform_0(%arg0: i32) -> (i32, i32) {
    %c0_i32 = arith.constant 0 : i32
    %c0_i32_0 = arith.constant 0 : i32
    return %arg0, %c0_i32 : i32, i32
  }
  func.func @transform_1(%arg0: i32) -> (i32, i32, i32) {
    %c0_i32 = arith.constant 0 : i32
    %c0_i32_0 = arith.constant 0 : i32
    %c0_i32_1 = arith.constant 0 : i32
    return %arg0, %c0_i32, %c0_i32_0 : i32, i32, i32
  }
  func.func @transform_2(%arg0: i32) -> (i32, i32) {
    %c0_i32 = arith.constant 0 : i32
    %c0_i32_0 = arith.constant 0 : i32
    return %arg0, %c0_i32 : i32, i32
  }
  func.func @transform_3(%arg0: i32) -> (i32, i32) {
    %c0_i32 = arith.constant 0 : i32
    %c0_i32_0 = arith.constant 0 : i32
    %c0_i32_1 = arith.constant 0 : i32
    return %c0_i32, %c0_i32_0 : i32, i32
  }
  func.func @transform_4(%arg0: i32) -> (i32, i32) {
    %c0_i32 = arith.constant 0 : i32
    %c0_i32_0 = arith.constant 0 : i32
    %c0_i32_1 = arith.constant 0 : i32
    return %c0_i32, %c0_i32_0 : i32, i32
  }
  func.func @transform_5(%arg0: i32) -> (i32, i32) {
    %c0_i32 = arith.constant 0 : i32
    %c0_i32_0 = arith.constant 0 : i32
    %c0_i32_1 = arith.constant 0 : i32
    return %c0_i32, %c0_i32_0 : i32, i32
  }
  func.func @transform_6(%arg0: i32) -> (i32, i32) {
    %c0_i32 = arith.constant 0 : i32
    %c0_i32_0 = arith.constant 0 : i32
    %c0_i32_1 = arith.constant 0 : i32
    return %c0_i32, %c0_i32_0 : i32, i32
  }
  func.func @transform_7(%arg0: i32) -> (i32, i32) {
    %c0_i32 = arith.constant 0 : i32
    %c0_i32_0 = arith.constant 0 : i32
    %c0_i32_1 = arith.constant 0 : i32
    return %c0_i32, %c0_i32_0 : i32, i32
  }
  func.func @transform_8(%arg0: i32) -> (i32, i32) {
    %c0_i32 = arith.constant 0 : i32
    %c0_i32_0 = arith.constant 0 : i32
    %c0_i32_1 = arith.constant 0 : i32
    return %c0_i32, %c0_i32_0 : i32, i32
  }
  func.func @transform_9(%arg0: i32) -> (i32, i32) {
    %c0_i32 = arith.constant 0 : i32
    %c0_i32_0 = arith.constant 0 : i32
    %c0_i32_1 = arith.constant 0 : i32
    return %c0_i32, %c0_i32_0 : i32, i32
  }
  func.func @transform_10(%arg0: i32) -> (i32, i32) {
    %c0_i32 = arith.constant 0 : i32
    %c0_i32_0 = arith.constant 0 : i32
    %c0_i32_1 = arith.constant 0 : i32
    return %c0_i32, %c0_i32_0 : i32, i32
  }
  func.func @transform_11(%arg0: i32) -> (i32, i32) {
    %c0_i32 = arith.constant 0 : i32
    %c0_i32_0 = arith.constant 0 : i32
    %c0_i32_1 = arith.constant 0 : i32
    return %c0_i32, %c0_i32_0 : i32, i32
  }
  func.func @transform_12(%arg0: i32) -> (i32, i32) {
    %c0_i32 = arith.constant 0 : i32
    %c0_i32_0 = arith.constant 0 : i32
    %c0_i32_1 = arith.constant 0 : i32
    return %c0_i32, %c0_i32_0 : i32, i32
  }
  func.func @transform_13(%arg0: i32) -> (i32, i32) {
    %c0_i32 = arith.constant 0 : i32
    %c0_i32_0 = arith.constant 0 : i32
    %c0_i32_1 = arith.constant 0 : i32
    return %c0_i32, %c0_i32_0 : i32, i32
  }
  func.func @transform_14(%arg0: i32) -> (i32, i32) {
    %c0_i32 = arith.constant 0 : i32
    %c0_i32_0 = arith.constant 0 : i32
    %c0_i32_1 = arith.constant 0 : i32
    return %c0_i32, %c0_i32_0 : i32, i32
  }
  func.func @transform_15(%arg0: i32) -> (i32, i32) {
    %c0_i32 = arith.constant 0 : i32
    %c0_i32_0 = arith.constant 0 : i32
    %c0_i32_1 = arith.constant 0 : i32
    return %c0_i32, %c0_i32_0 : i32, i32
  }
  func.func @transform_16(%arg0: i32) -> (i32, i32) {
    %c0_i32 = arith.constant 0 : i32
    %c0_i32_0 = arith.constant 0 : i32
    %c0_i32_1 = arith.constant 0 : i32
    return %c0_i32, %c0_i32_0 : i32, i32
  }
  func.func @transform_17(%arg0: i32) -> (i32, i32) {
    %c0_i32 = arith.constant 0 : i32
    %c0_i32_0 = arith.constant 0 : i32
    %c0_i32_1 = arith.constant 0 : i32
    return %c0_i32, %c0_i32_0 : i32, i32
  }
  func.func @transform_18(%arg0: i32) -> (i32, i32) {
    %c0_i32 = arith.constant 0 : i32
    %c0_i32_0 = arith.constant 0 : i32
    %c0_i32_1 = arith.constant 0 : i32
    return %c0_i32, %c0_i32_0 : i32, i32
  }
  func.func @transform_19(%arg0: i32) -> (i32, i32) {
    %c0_i32 = arith.constant 0 : i32
    %c0_i32_0 = arith.constant 0 : i32
    %c0_i32_1 = arith.constant 0 : i32
    return %c0_i32, %c0_i32_0 : i32, i32
  }
  func.func @transform_20(%arg0: i32) -> (i32, i32) {
    %c0_i32 = arith.constant 0 : i32
    %c0_i32_0 = arith.constant 0 : i32
    %c0_i32_1 = arith.constant 0 : i32
    return %c0_i32, %c0_i32_0 : i32, i32
  }
  func.func @transform_21(%arg0: i32) -> (i32, i32) {
    %c0_i32 = arith.constant 0 : i32
    %c0_i32_0 = arith.constant 0 : i32
    %c0_i32_1 = arith.constant 0 : i32
    return %c0_i32, %c0_i32_0 : i32, i32
  }
  func.func @transform_22(%arg0: i32) -> (i32, i32) {
    %c0_i32 = arith.constant 0 : i32
    %c0_i32_0 = arith.constant 0 : i32
    return %arg0, %c0_i32 : i32, i32
  }
  func.func @transform_23(%arg0: i32) -> (i32, i32) {
    %c0_i32 = arith.constant 0 : i32
    %c0_i32_0 = arith.constant 0 : i32
    return %arg0, %c0_i32 : i32, i32
  }
}

</mosaic_0001>

<llo_original>
// kernel: lcmvae_forward.1
$region0: #{lcmvae_forward.1}
  #allocation0 [shape = 'u32[]', space=smem, size = 0x4, offset = 0x4, fixed_abs, tag = 'smem constant byte address 0x4 - core index']
  #allocation1 [shape = 'u32[144,128]{1,0:T(1,128)}', space=vmem, size = 0x12000, scoped, tag = 'internal scratch']
  %s0 = inlined_call_operand.vmem [shape: f32[8,1024], index: 0, kind: input, shape index: {}]
  %s1 = inlined_call_operand.vmem [shape: f32[8,8,16], index: 1, kind: input, shape index: {}]
  %s2 = inlined_call_operand.vmem [shape: f32[8,16], index: 2, kind: input, shape index: {}]
  %s3 = inlined_call_operand.vmem [shape: f32[1024,64], index: 3, kind: input, shape index: {}]
  %s4 = inlined_call_operand.vmem [shape: f32[1,64], index: 4, kind: input, shape index: {}]
  %s5 = inlined_call_operand.vmem [shape: f32[16,32], index: 5, kind: input, shape index: {}]
  %s6 = inlined_call_operand.vmem [shape: f32[1,32], index: 6, kind: input, shape index: {}]
  %s7 = inlined_call_operand.vmem [shape: f32[64,64], index: 7, kind: input, shape index: {}]
  %s8 = inlined_call_operand.vmem [shape: f32[32,64], index: 8, kind: input, shape index: {}]
  %s9 = inlined_call_operand.vmem [shape: f32[1,64], index: 9, kind: input, shape index: {}]
  %s10 = inlined_call_operand.vmem [shape: f32[64,16], index: 10, kind: input, shape index: {}]
  %s11 = inlined_call_operand.vmem [shape: f32[1,16], index: 11, kind: input, shape index: {}]
  %s12 = inlined_call_operand.vmem [shape: f32[64,16], index: 12, kind: input, shape index: {}]
  %s13 = inlined_call_operand.vmem [shape: f32[1,16], index: 13, kind: input, shape index: {}]
  %s14 = inlined_call_operand.vmem [shape: f32[16,64], index: 14, kind: input, shape index: {}]
  %s15 = inlined_call_operand.vmem [shape: f32[1,64], index: 15, kind: input, shape index: {}]
  %s16 = inlined_call_operand.vmem [shape: f32[64,1024], index: 16, kind: input, shape index: {}]
  %s17 = inlined_call_operand.vmem [shape: f32[1,1024], index: 17, kind: input, shape index: {}]
  %s18 = inlined_call_operand.vmem [shape: f32[16,64], index: 18, kind: input, shape index: {}]
  %s19 = inlined_call_operand.vmem [shape: f32[1,64], index: 19, kind: input, shape index: {}]
  %s20 = inlined_call_operand.vmem [shape: f32[64,32], index: 20, kind: input, shape index: {}]
  %s21 = inlined_call_operand.vmem [shape: f32[1,32], index: 21, kind: input, shape index: {}]
  %s22 = inlined_call_operand.vmem [shape: f32[8,1024], index: 22, kind: output, shape index: {0}]
  %s23 = inlined_call_operand.vmem [shape: f32[8,128], index: 23, kind: output, shape index: {1}]
  %24 = xla_tuple %s22, %s23
  %s25 = sld [smem:[#allocation0]]
  $region106: #{lcmvae_forward.1} parent=0
    _
  %s27 = ssub.s32 1, %s25
  %s28 = scalar_select 0, %s27, %s25
  // Predicated region
  $region2: #{lcmvae_forward.1} parent=0 // pred_check
    _
  $region3: #{lcmvae_forward.1} parent=0 // pred_check_branch
    %30 = sbr.rel (0) target = $region5
  $region4: #{lcmvae_forward.1} parent=0 // pred_region
    _
  $region5: #{lcmvae_forward.1} parent=0 // pred_fallthru
    _
  // Predicated region
  $region6: #{lcmvae_forward.1} parent=0 // pred_check
    _
  $region7: #{lcmvae_forward.1} parent=0 // pred_check_branch
    %32 = sbr.rel (0) target = $region9
  $region8: #{lcmvae_forward.1} parent=0 // pred_region
    _
  $region9: #{lcmvae_forward.1} parent=0 // pred_fallthru
    _
  // Predicated region
  $region10: #{lcmvae_forward.1} parent=0 // pred_check
    _
  $region11: #{lcmvae_forward.1} parent=0 // pred_check_branch
    %34 = sbr.rel (0) target = $region13
  $region12: #{lcmvae_forward.1} parent=0 // pred_region
    _
  $region13: #{lcmvae_forward.1} parent=0 // pred_fallthru
    _
  // Predicated region
  $region14: #{lcmvae_forward.1} parent=0 // pred_check
    _
  $region15: #{lcmvae_forward.1} parent=0 // pred_check_branch
    %36 = sbr.rel (0) target = $region17
  $region16: #{lcmvae_forward.1} parent=0 // pred_region
    _
  $region17: #{lcmvae_forward.1} parent=0 // pred_fallthru
    _
  // Predicated region
  $region18: #{lcmvae_forward.1} parent=0 // pred_check
    _
  $region19: #{lcmvae_forward.1} parent=0 // pred_check_branch
    %38 = sbr.rel (0) target = $region21
  $region20: #{lcmvae_forward.1} parent=0 // pred_region
    _
  $region21: #{lcmvae_forward.1} parent=0 // pred_fallthru
    _
  // Predicated region
  $region22: #{lcmvae_forward.1} parent=0 // pred_check
    _
  $region23: #{lcmvae_forward.1} parent=0 // pred_check_branch
    %40 = sbr.rel (0) target = $region25
  $region24: #{lcmvae_forward.1} parent=0 // pred_region
    _
  $region25: #{lcmvae_forward.1} parent=0 // pred_fallthru
    _
  // Predicated region
  $region26: #{lcmvae_forward.1} parent=0 // pred_check
    _
  $region27: #{lcmvae_forward.1} parent=0 // pred_check_branch
    %42 = sbr.rel (0) target = $region29
  $region28: #{lcmvae_forward.1} parent=0 // pred_region
    _
  $region29: #{lcmvae_forward.1} parent=0 // pred_fallthru
    _
  // Predicated region
  $region30: #{lcmvae_forward.1} parent=0 // pred_check
    _
  $region31: #{lcmvae_forward.1} parent=0 // pred_check_branch
    %44 = sbr.rel (0) target = $region33
  $region32: #{lcmvae_forward.1} parent=0 // pred_region
    _
  $region33: #{lcmvae_forward.1} parent=0 // pred_fallthru
    _
  // Predicated region
  $region34: #{lcmvae_forward.1} parent=0 // pred_check
    _
  $region35: #{lcmvae_forward.1} parent=0 // pred_check_branch
    %46 = sbr.rel (0) target = $region37
  $region36: #{lcmvae_forward.1} parent=0 // pred_region
    _
  $region37: #{lcmvae_forward.1} parent=0 // pred_fallthru
    _
  // Predicated region
  $region38: #{lcmvae_forward.1} parent=0 // pred_check
    _
  $region39: #{lcmvae_forward.1} parent=0 // pred_check_branch
    %48 = sbr.rel (0) target = $region41
  $region40: #{lcmvae_forward.1} parent=0 // pred_region
    _
  $region41: #{lcmvae_forward.1} parent=0 // pred_fallthru
    _
  // Predicated region
  $region42: #{lcmvae_forward.1} parent=0 // pred_check
    _
  $region43: #{lcmvae_forward.1} parent=0 // pred_check_branch
    %50 = sbr.rel (0) target = $region45
  $region44: #{lcmvae_forward.1} parent=0 // pred_region
    _
  $region45: #{lcmvae_forward.1} parent=0 // pred_fallthru
    _
  // Predicated region
  $region46: #{lcmvae_forward.1} parent=0 // pred_check
    _
  $region47: #{lcmvae_forward.1} parent=0 // pred_check_branch
    %52 = sbr.rel (0) target = $region49
  $region48: #{lcmvae_forward.1} parent=0 // pred_region
    _
  $region49: #{lcmvae_forward.1} parent=0 // pred_fallthru
    _
  // Predicated region
  $region50: #{lcmvae_forward.1} parent=0 // pred_check
    _
  $region51: #{lcmvae_forward.1} parent=0 // pred_check_branch
    %54 = sbr.rel (0) target = $region53
  $region52: #{lcmvae_forward.1} parent=0 // pred_region
    _
  $region53: #{lcmvae_forward.1} parent=0 // pred_fallthru
    _
  // Predicated region
  $region54: #{lcmvae_forward.1} parent=0 // pred_check
    _
  $region55: #{lcmvae_forward.1} parent=0 // pred_check_branch
    %56 = sbr.rel (0) target = $region57
  $region56: #{lcmvae_forward.1} parent=0 // pred_region
    _
  $region57: #{lcmvae_forward.1} parent=0 // pred_fallthru
    _
  // Predicated region
  $region58: #{lcmvae_forward.1} parent=0 // pred_check
    _
  $region59: #{lcmvae_forward.1} parent=0 // pred_check_branch
    %58 = sbr.rel (0) target = $region61
  $region60: #{lcmvae_forward.1} parent=0 // pred_region
    _
  $region61: #{lcmvae_forward.1} parent=0 // pred_fallthru
    _
  // Predicated region
  $region62: #{lcmvae_forward.1} parent=0 // pred_check
    _
  $region63: #{lcmvae_forward.1} parent=0 // pred_check_branch
    %60 = sbr.rel (0) target = $region65
  $region64: #{lcmvae_forward.1} parent=0 // pred_region
    _
  $region65: #{lcmvae_forward.1} parent=0 // pred_fallthru
    _
  // Predicated region
  $region66: #{lcmvae_forward.1} parent=0 // pred_check
    _
  $region67: #{lcmvae_forward.1} parent=0 // pred_check_branch
    %62 = sbr.rel (0) target = $region69
  $region68: #{lcmvae_forward.1} parent=0 // pred_region
    _
  $region69: #{lcmvae_forward.1} parent=0 // pred_fallthru
    _
  // Predicated region
  $region70: #{lcmvae_forward.1} parent=0 // pred_check
    _
  $region71: #{lcmvae_forward.1} parent=0 // pred_check_branch
    %64 = sbr.rel (0) target = $region73
  $region72: #{lcmvae_forward.1} parent=0 // pred_region
    _
  $region73: #{lcmvae_forward.1} parent=0 // pred_fallthru
    _
  // Predicated region
  $region74: #{lcmvae_forward.1} parent=0 // pred_check
    _
  $region75: #{lcmvae_forward.1} parent=0 // pred_check_branch
    %66 = sbr.rel (0) target = $region77
  $region76: #{lcmvae_forward.1} parent=0 // pred_region
    _
  $region77: #{lcmvae_forward.1} parent=0 // pred_fallthru
    _
  // Predicated region
  $region78: #{lcmvae_forward.1} parent=0 // pred_check
    _
  $region79: #{lcmvae_forward.1} parent=0 // pred_check_branch
    %68 = sbr.rel (0) target = $region81
  $region80: #{lcmvae_forward.1} parent=0 // pred_region
    _
  $region81: #{lcmvae_forward.1} parent=0 // pred_fallthru
    _
  // Predicated region
  $region82: #{lcmvae_forward.1} parent=0 // pred_check
    _
  $region83: #{lcmvae_forward.1} parent=0 // pred_check_branch
    %70 = sbr.rel (0) target = $region85
  $region84: #{lcmvae_forward.1} parent=0 // pred_region
    _
  $region85: #{lcmvae_forward.1} parent=0 // pred_fallthru
    _
  // Predicated region
  $region86: #{lcmvae_forward.1} parent=0 // pred_check
    _
  $region87: #{lcmvae_forward.1} parent=0 // pred_check_branch
    %72 = sbr.rel (0) target = $region89
  $region88: #{lcmvae_forward.1} parent=0 // pred_region
    _
  $region89: #{lcmvae_forward.1} parent=0 // pred_fallthru
    _
  %v73 = vld [vmem:[%s0] sm:$0xff]
  %v74 = vld [vmem:[%s0 + $0x8] sm:$0xff]
  %v75 = vld [vmem:[%s0 + $0x10] sm:$0xff]
  %v76 = vld [vmem:[%s0 + $0x18] sm:$0xff]
  %v77 = vld [vmem:[%s0 + $0x20] sm:$0xff]
  %v78 = vld [vmem:[%s0 + $0x28] sm:$0xff]
  %v79 = vld [vmem:[%s0 + $0x30] sm:$0xff]
  %v80 = vld [vmem:[%s0 + $0x38] sm:$0xff]
  %v81 = vld [vmem:[%s3] sm:$0xff]
  %v82 = vld [vmem:[%s3 + $0x8] sm:$0xff]
  %v83 = vld [vmem:[%s3 + $0x10] sm:$0xff]
  %v84 = vld [vmem:[%s3 + $0x18] sm:$0xff]
  %v85 = vld [vmem:[%s3 + $0x20] sm:$0xff]
  %v86 = vld [vmem:[%s3 + $0x28] sm:$0xff]
  %v87 = vld [vmem:[%s3 + $0x30] sm:$0xff]
  %v88 = vld [vmem:[%s3 + $0x38] sm:$0xff]
  %v89 = vld [vmem:[%s3 + $0x40] sm:$0xff]
  %v90 = vld [vmem:[%s3 + $0x48] sm:$0xff]
  %v91 = vld [vmem:[%s3 + $0x50] sm:$0xff]
  %v92 = vld [vmem:[%s3 + $0x58] sm:$0xff]
  %v93 = vld [vmem:[%s3 + $0x60] sm:$0xff]
  %v94 = vld [vmem:[%s3 + $0x68] sm:$0xff]
  %v95 = vld [vmem:[%s3 + $0x70] sm:$0xff]
  %v96 = vld [vmem:[%s3 + $0x78] sm:$0xff]
  %v97 = vld [vmem:[%s3 + $0x80] sm:$0xff]
  %v98 = vld [vmem:[%s3 + $0x88] sm:$0xff]
  %v99 = vld [vmem:[%s3 + $0x90] sm:$0xff]
  %v100 = vld [vmem:[%s3 + $0x98] sm:$0xff]
  %v101 = vld [vmem:[%s3 + $0xa0] sm:$0xff]
  %v102 = vld [vmem:[%s3 + $0xa8] sm:$0xff]
  %v103 = vld [vmem:[%s3 + $0xb0] sm:$0xff]
  %v104 = vld [vmem:[%s3 + $0xb8] sm:$0xff]
  %v105 = vld [vmem:[%s3 + $0xc0] sm:$0xff]
  %v106 = vld [vmem:[%s3 + $0xc8] sm:$0xff]
  %v107 = vld [vmem:[%s3 + $0xd0] sm:$0xff]
  %v108 = vld [vmem:[%s3 + $0xd8] sm:$0xff]
  %v109 = vld [vmem:[%s3 + $0xe0] sm:$0xff]
  %v110 = vld [vmem:[%s3 + $0xe8] sm:$0xff]
  %v111 = vld [vmem:[%s3 + $0xf0] sm:$0xff]
  %v112 = vld [vmem:[%s3 + $0xf8] sm:$0xff]
  %v113 = vld [vmem:[%s3 + $0x100] sm:$0xff]
  %v114 = vld [vmem:[%s3 + $0x108] sm:$0xff]
  %v115 = vld [vmem:[%s3 + $0x110] sm:$0xff]
  %v116 = vld [vmem:[%s3 + $0x118] sm:$0xff]
  %v117 = vld [vmem:[%s3 + $0x120] sm:$0xff]
  %v118 = vld [vmem:[%s3 + $0x128] sm:$0xff]
  %v119 = vld [vmem:[%s3 + $0x130] sm:$0xff]
  %v120 = vld [vmem:[%s3 + $0x138] sm:$0xff]
  %v121 = vld [vmem:[%s3 + $0x140] sm:$0xff]
  %v122 = vld [vmem:[%s3 + $0x148] sm:$0xff]
  %v123 = vld [vmem:[%s3 + $0x150] sm:$0xff]
  %v124 = vld [vmem:[%s3 + $0x158] sm:$0xff]
  %v125 = vld [vmem:[%s3 + $0x160] sm:$0xff]
  %v126 = vld [vmem:[%s3 + $0x168] sm:$0xff]
  %v127 = vld [vmem:[%s3 + $0x170] sm:$0xff]
  %v128 = vld [vmem:[%s3 + $0x178] sm:$0xff]
  %v129 = vld [vmem:[%s3 + $0x180] sm:$0xff]
  %v130 = vld [vmem:[%s3 + $0x188] sm:$0xff]
  %v131 = vld [vmem:[%s3 + $0x190] sm:$0xff]
  %v132 = vld [vmem:[%s3 + $0x198] sm:$0xff]
  %v133 = vld [vmem:[%s3 + $0x1a0] sm:$0xff]
  %v134 = vld [vmem:[%s3 + $0x1a8] sm:$0xff]
  %v135 = vld [vmem:[%s3 + $0x1b0] sm:$0xff]
  %v136 = vld [vmem:[%s3 + $0x1b8] sm:$0xff]
  %v137 = vld [vmem:[%s3 + $0x1c0] sm:$0xff]
  %v138 = vld [vmem:[%s3 + $0x1c8] sm:$0xff]
  %v139 = vld [vmem:[%s3 + $0x1d0] sm:$0xff]
  %v140 = vld [vmem:[%s3 + $0x1d8] sm:$0xff]
  %v141 = vld [vmem:[%s3 + $0x1e0] sm:$0xff]
  %v142 = vld [vmem:[%s3 + $0x1e8] sm:$0xff]
  %v143 = vld [vmem:[%s3 + $0x1f0] sm:$0xff]
  %v144 = vld [vmem:[%s3 + $0x1f8] sm:$0xff]
  %v145 = vld [vmem:[%s3 + $0x200] sm:$0xff]
  %v146 = vld [vmem:[%s3 + $0x208] sm:$0xff]
  %v147 = vld [vmem:[%s3 + $0x210] sm:$0xff]
  %v148 = vld [vmem:[%s3 + $0x218] sm:$0xff]
  %v149 = vld [vmem:[%s3 + $0x220] sm:$0xff]
  %v150 = vld [vmem:[%s3 + $0x228] sm:$0xff]
  %v151 = vld [vmem:[%s3 + $0x230] sm:$0xff]
  %v152 = vld [vmem:[%s3 + $0x238] sm:$0xff]
  %v153 = vld [vmem:[%s3 + $0x240] sm:$0xff]
  %v154 = vld [vmem:[%s3 + $0x248] sm:$0xff]
  %v155 = vld [vmem:[%s3 + $0x250] sm:$0xff]
  %v156 = vld [vmem:[%s3 + $0x258] sm:$0xff]
  %v157 = vld [vmem:[%s3 + $0x260] sm:$0xff]
  %v158 = vld [vmem:[%s3 + $0x268] sm:$0xff]
  %v159 = vld [vmem:[%s3 + $0x270] sm:$0xff]
  %v160 = vld [vmem:[%s3 + $0x278] sm:$0xff]
  %v161 = vld [vmem:[%s3 + $0x280] sm:$0xff]
  %v162 = vld [vmem:[%s3 + $0x288] sm:$0xff]
  %v163 = vld [vmem:[%s3 + $0x290] sm:$0xff]
  %v164 = vld [vmem:[%s3 + $0x298] sm:$0xff]
  %v165 = vld [vmem:[%s3 + $0x2a0] sm:$0xff]
  %v166 = vld [vmem:[%s3 + $0x2a8] sm:$0xff]
  %v167 = vld [vmem:[%s3 + $0x2b0] sm:$0xff]
  %v168 = vld [vmem:[%s3 + $0x2b8] sm:$0xff]
  %v169 = vld [vmem:[%s3 + $0x2c0] sm:$0xff]
  %v170 = vld [vmem:[%s3 + $0x2c8] sm:$0xff]
  %v171 = vld [vmem:[%s3 + $0x2d0] sm:$0xff]
  %v172 = vld [vmem:[%s3 + $0x2d8] sm:$0xff]
  %v173 = vld [vmem:[%s3 + $0x2e0] sm:$0xff]
  %v174 = vld [vmem:[%s3 + $0x2e8] sm:$0xff]
  %v175 = vld [vmem:[%s3 + $0x2f0] sm:$0xff]
  %v176 = vld [vmem:[%s3 + $0x2f8] sm:$0xff]
  %v177 = vld [vmem:[%s3 + $0x300] sm:$0xff]
  %v178 = vld [vmem:[%s3 + $0x308] sm:$0xff]
  %v179 = vld [vmem:[%s3 + $0x310] sm:$0xff]
  %v180 = vld [vmem:[%s3 + $0x318] sm:$0xff]
  %v181 = vld [vmem:[%s3 + $0x320] sm:$0xff]
  %v182 = vld [vmem:[%s3 + $0x328] sm:$0xff]
  %v183 = vld [vmem:[%s3 + $0x330] sm:$0xff]
  %v184 = vld [vmem:[%s3 + $0x338] sm:$0xff]
  %v185 = vld [vmem:[%s3 + $0x340] sm:$0xff]
  %v186 = vld [vmem:[%s3 + $0x348] sm:$0xff]
  %v187 = vld [vmem:[%s3 + $0x350] sm:$0xff]
  %v188 = vld [vmem:[%s3 + $0x358] sm:$0xff]
  %v189 = vld [vmem:[%s3 + $0x360] sm:$0xff]
  %v190 = vld [vmem:[%s3 + $0x368] sm:$0xff]
  %v191 = vld [vmem:[%s3 + $0x370] sm:$0xff]
  %v192 = vld [vmem:[%s3 + $0x378] sm:$0xff]
  %v193 = vld [vmem:[%s3 + $0x380] sm:$0xff]
  %v194 = vld [vmem:[%s3 + $0x388] sm:$0xff]
  %v195 = vld [vmem:[%s3 + $0x390] sm:$0xff]
  %v196 = vld [vmem:[%s3 + $0x398] sm:$0xff]
  %v197 = vld [vmem:[%s3 + $0x3a0] sm:$0xff]
  %v198 = vld [vmem:[%s3 + $0x3a8] sm:$0xff]
  %v199 = vld [vmem:[%s3 + $0x3b0] sm:$0xff]
  %v200 = vld [vmem:[%s3 + $0x3b8] sm:$0xff]
  %v201 = vld [vmem:[%s3 + $0x3c0] sm:$0xff]
  %v202 = vld [vmem:[%s3 + $0x3c8] sm:$0xff]
  %v203 = vld [vmem:[%s3 + $0x3d0] sm:$0xff]
  %v204 = vld [vmem:[%s3 + $0x3d8] sm:$0xff]
  %v205 = vld [vmem:[%s3 + $0x3e0] sm:$0xff]
  %v206 = vld [vmem:[%s3 + $0x3e8] sm:$0xff]
  %v207 = vld [vmem:[%s3 + $0x3f0] sm:$0xff]
  %v208 = vld [vmem:[%s3 + $0x3f8] sm:$0xff]
  %v209 = vld [vmem:[%s4] sm:$0x1]
  %v211 = vlaneseq
  %v212 = vshrl.u32 %v211, 7
  %v213 = vsub.s32 0, %v212
  %v214 = vrot.slane %v209, %v213
  %216 = vmatprep.subr.mxu0 0.0
  %217 = vmatpush1.msra.mxu0 %v81
  %218 = vmatprep.subr.mxu0 0.0
  %219 = vmatpush1.msra.mxu0 %v82
  %220 = vmatprep.subr.mxu0 0.0
  %221 = vmatpush1.msra.mxu0 %v83
  %222 = vmatprep.subr.mxu0 0.0
  %223 = vmatpush1.msra.mxu0 %v84
  %224 = vmatprep.subr.mxu0 0.0
  %225 = vmatpush1.msra.mxu0 %v85
  %226 = vmatprep.subr.mxu0 0.0
  %227 = vmatpush1.msra.mxu0 %v86
  %228 = vmatprep.subr.mxu0 0.0
  %229 = vmatpush1.msra.mxu0 %v87
  %230 = vmatprep.subr.mxu0 0.0
  %231 = vmatpush1.msra.mxu0 %v88
  %232 = vmatprep.subr.mxu0 0.0
  %233 = vmatpush1.msra.mxu0 %v89
  %234 = vmatprep.subr.mxu0 0.0
  %235 = vmatpush1.msra.mxu0 %v90
  %236 = vmatprep.subr.mxu0 0.0
  %237 = vmatpush1.msra.mxu0 %v91
  %238 = vmatprep.subr.mxu0 0.0
  %239 = vmatpush1.msra.mxu0 %v92
  %240 = vmatprep.subr.mxu0 0.0
  %241 = vmatpush1.msra.mxu0 %v93
  %242 = vmatprep.subr.mxu0 0.0
  %243 = vmatpush1.msra.mxu0 %v94
  %244 = vmatprep.subr.mxu0 0.0
  %245 = vmatpush1.msra.mxu0 %v95
  %246 = vmatprep.subr.mxu0 0.0
  %247 = vmatpush1.msra.mxu0 %v96
  %248 = vmatprep.subr.mxu0 0.0
  %249 = vmatpush1.msra.mxu0 %v97
  %250 = vmatprep.subr.mxu0 0.0
  %251 = vmatpush1.msra.mxu0 %v98
  %252 = vmatprep.subr.mxu0 0.0
  %253 = vmatpush1.msra.mxu0 %v99
  %254 = vmatprep.subr.mxu0 0.0
  %255 = vmatpush1.msra.mxu0 %v100
  %256 = vmatprep.subr.mxu0 0.0
  %257 = vmatpush1.msra.mxu0 %v101
  %258 = vmatprep.subr.mxu0 0.0
  %259 = vmatpush1.msra.mxu0 %v102
  %260 = vmatprep.subr.mxu0 0.0
  %261 = vmatpush1.msra.mxu0 %v103
  %262 = vmatprep.subr.mxu0 0.0
  %263 = vmatpush1.msra.mxu0 %v104
  %264 = vmatprep.subr.mxu0 0.0
  %265 = vmatpush1.msra.mxu0 %v105
  %266 = vmatprep.subr.mxu0 0.0
  %267 = vmatpush1.msra.mxu0 %v106
  %268 = vmatprep.subr.mxu0 0.0
  %269 = vmatpush1.msra.mxu0 %v107
  %270 = vmatprep.subr.mxu0 0.0
  %271 = vmatpush1.msra.mxu0 %v108
  %272 = vmatprep.subr.mxu0 0.0
  %273 = vmatpush1.msra.mxu0 %v109
  %274 = vmatprep.subr.mxu0 0.0
  %275 = vmatpush1.msra.mxu0 %v110
  %276 = vmatprep.subr.mxu0 0.0
  %277 = vmatpush1.msra.mxu0 %v111
  %278 = vmatprep.subr.mxu0 0.0
  %279 = vmatpush1.msra.mxu0 %v112
  %280 = vmatprep.mubr.f32.mxu0 %v74
  %281 = vmatmul.mubr.f32.gmra.mrb[0].mxu0 %v73
  %v282 = vpop.f32.mrb[0].mxu0
  %v283 = vadd.f32 %v214, %v282
  %v284 = vpop.f32.mrb[0].mxu0
  %285 = vdwg.mxu0
  %286 = vmatprep.subr.mxu0 0.0
  %287 = vmatpush1.msra.mxu0 %v113
  %288 = vmatprep.subr.mxu0 0.0
  %289 = vmatpush1.msra.mxu0 %v114
  %290 = vmatprep.subr.mxu0 0.0
  %291 = vmatpush1.msra.mxu0 %v115
  %292 = vmatprep.subr.mxu0 0.0
  %293 = vmatpush1.msra.mxu0 %v116
  %294 = vmatprep.subr.mxu0 0.0
  %295 = vmatpush1.msra.mxu0 %v117
  %296 = vmatprep.subr.mxu0 0.0
  %297 = vmatpush1.msra.mxu0 %v118
  %298 = vmatprep.subr.mxu0 0.0
  %299 = vmatpush1.msra.mxu0 %v119
  %300 = vmatprep.subr.mxu0 0.0
  %301 = vmatpush1.msra.mxu0 %v120
  %302 = vmatprep.subr.mxu0 0.0
  %303 = vmatpush1.msra.mxu0 %v121
  %304 = vmatprep.subr.mxu0 0.0
  %305 = vmatpush1.msra.mxu0 %v122
  %306 = vmatprep.subr.mxu0 0.0
  %307 = vmatpush1.msra.mxu0 %v123
  %308 = vmatprep.subr.mxu0 0.0
  %309 = vmatpush1.msra.mxu0 %v124
  %310 = vmatprep.subr.mxu0 0.0
  %311 = vmatpush1.msra.mxu0 %v125
  %312 = vmatprep.subr.mxu0 0.0
  %313 = vmatpush1.msra.mxu0 %v126
  %314 = vmatprep.subr.mxu0 0.0
  %315 = vmatpush1.msra.mxu0 %v127
  %316 = vmatprep.subr.mxu0 0.0
  %317 = vmatpush1.msra.mxu0 %v128
  %318 = vmatprep.subr.mxu0 0.0
  %319 = vmatpush1.msra.mxu0 %v129
  %320 = vmatprep.subr.mxu0 0.0
  %321 = vmatpush1.msra.mxu0 %v130
  %322 = vmatprep.subr.mxu0 0.0
  %323 = vmatpush1.msra.mxu0 %v131
  %324 = vmatprep.subr.mxu0 0.0
  %325 = vmatpush1.msra.mxu0 %v132
  %326 = vmatprep.subr.mxu0 0.0
  %327 = vmatpush1.msra.mxu0 %v133
  %328 = vmatprep.subr.mxu0 0.0
  %329 = vmatpush1.msra.mxu0 %v134
  %330 = vmatprep.subr.mxu0 0.0
  %331 = vmatpush1.msra.mxu0 %v135
  %332 = vmatprep.subr.mxu0 0.0
  %333 = vmatpush1.msra.mxu0 %v136
  %334 = vmatprep.subr.mxu0 0.0
  %335 = vmatpush1.msra.mxu0 %v137
  %336 = vmatprep.subr.mxu0 0.0
  %337 = vmatpush1.msra.mxu0 %v138
  %338 = vmatprep.subr.mxu0 0.0
  %339 = vmatpush1.msra.mxu0 %v139
  %340 = vmatprep.subr.mxu0 0.0
  %341 = vmatpush1.msra.mxu0 %v140
  %342 = vmatprep.subr.mxu0 0.0
  %343 = vmatpush1.msra.mxu0 %v141
  %344 = vmatprep.subr.mxu0 0.0
  %345 = vmatpush1.msra.mxu0 %v142
  %346 = vmatprep.subr.mxu0 0.0
  %347 = vmatpush1.msra.mxu0 %v143
  %348 = vmatprep.subr.mxu0 0.0
  %349 = vmatpush1.msra.mxu0 %v144
  %350 = vmatprep.mubr.f32.mxu0 %v76
  %351 = vmatmul.mubr.f32.gmra.mrb[0].mxu0 %v75
  %v352 = vpop.f32.mrb[0].mxu0
  %v353 = vadd.f32 %v283, %v352
  %v354 = vpop.f32.mrb[0].mxu0
  %355 = vdwg.mxu0
  %356 = vmatprep.subr.mxu0 0.0
  %357 = vmatpush1.msra.mxu0 %v145
  %358 = vmatprep.subr.mxu0 0.0
  %359 = vmatpush1.msra.mxu0 %v146
  %360 = vmatprep.subr.mxu0 0.0
  %361 = vmatpush1.msra.mxu0 %v147
  %362 = vmatprep.subr.mxu0 0.0
  %363 = vmatpush1.msra.mxu0 %v148
  %364 = vmatprep.subr.mxu0 0.0
  %365 = vmatpush1.msra.mxu0 %v149
  %366 = vmatprep.subr.mxu0 0.0
  %367 = vmatpush1.msra.mxu0 %v150
  %368 = vmatprep.subr.mxu0 0.0
  %369 = vmatpush1.msra.mxu0 %v151
  %370 = vmatprep.subr.mxu0 0.0
  %371 = vmatpush1.msra.mxu0 %v152
  %372 = vmatprep.subr.mxu0 0.0
  %373 = vmatpush1.msra.mxu0 %v153
  %374 = vmatprep.subr.mxu0 0.0
  %375 = vmatpush1.msra.mxu0 %v154
  %376 = vmatprep.subr.mxu0 0.0
  %377 = vmatpush1.msra.mxu0 %v155
  %378 = vmatprep.subr.mxu0 0.0
  %379 = vmatpush1.msra.mxu0 %v156
  %380 = vmatprep.subr.mxu0 0.0
  %381 = vmatpush1.msra.mxu0 %v157
  %382 = vmatprep.subr.mxu0 0.0
  %383 = vmatpush1.msra.mxu0 %v158
  %384 = vmatprep.subr.mxu0 0.0
  %385 = vmatpush1.msra.mxu0 %v159
  %386 = vmatprep.subr.mxu0 0.0
  %387 = vmatpush1.msra.mxu0 %v160
  %388 = vmatprep.subr.mxu0 0.0
  %389 = vmatpush1.msra.mxu0 %v161
  %390 = vmatprep.subr.mxu0 0.0
  %391 = vmatpush1.msra.mxu0 %v162
  %392 = vmatprep.subr.mxu0 0.0
  %393 = vmatpush1.msra.mxu0 %v163
  %394 = vmatprep.subr.mxu0 0.0
  %395 = vmatpush1.msra.mxu0 %v164
  %396 = vmatprep.subr.mxu0 0.0
  %397 = vmatpush1.msra.mxu0 %v165
  %398 = vmatprep.subr.mxu0 0.0
  %399 = vmatpush1.msra.mxu0 %v166
  %400 = vmatprep.subr.mxu0 0.0
  %401 = vmatpush1.msra.mxu0 %v167
  %402 = vmatprep.subr.mxu0 0.0
  %403 = vmatpush1.msra.mxu0 %v168
  %404 = vmatprep.subr.mxu0 0.0
  %405 = vmatpush1.msra.mxu0 %v169
  %406 = vmatprep.subr.mxu0 0.0
  %407 = vmatpush1.msra.mxu0 %v170
  %408 = vmatprep.subr.mxu0 0.0
  %409 = vmatpush1.msra.mxu0 %v171
  %410 = vmatprep.subr.mxu0 0.0
  %411 = vmatpush1.msra.mxu0 %v172
  %412 = vmatprep.subr.mxu0 0.0
  %413 = vmatpush1.msra.mxu0 %v173
  %414 = vmatprep.subr.mxu0 0.0
  %415 = vmatpush1.msra.mxu0 %v174
  %416 = vmatprep.subr.mxu0 0.0
  %417 = vmatpush1.msra.mxu0 %v175
  %418 = vmatprep.subr.mxu0 0.0
  %419 = vmatpush1.msra.mxu0 %v176
  %420 = vmatprep.mubr.f32.mxu0 %v78
  %421 = vmatmul.mubr.f32.gmra.mrb[0].mxu0 %v77
  %v422 = vpop.f32.mrb[0].mxu0
  %v423 = vadd.f32 %v353, %v422
  %v424 = vpop.f32.mrb[0].mxu0
  %425 = vdwg.mxu0
  %426 = vmatprep.subr.mxu0 0.0
  %427 = vmatpush1.msra.mxu0 %v177
  %428 = vmatprep.subr.mxu0 0.0
  %429 = vmatpush1.msra.mxu0 %v178
  %430 = vmatprep.subr.mxu0 0.0
  %431 = vmatpush1.msra.mxu0 %v179
  %432 = vmatprep.subr.mxu0 0.0
  %433 = vmatpush1.msra.mxu0 %v180
  %434 = vmatprep.subr.mxu0 0.0
  %435 = vmatpush1.msra.mxu0 %v181
  %436 = vmatprep.subr.mxu0 0.0
  %437 = vmatpush1.msra.mxu0 %v182
  %438 = vmatprep.subr.mxu0 0.0
  %439 = vmatpush1.msra.mxu0 %v183
  %440 = vmatprep.subr.mxu0 0.0
  %441 = vmatpush1.msra.mxu0 %v184
  %442 = vmatprep.subr.mxu0 0.0
  %443 = vmatpush1.msra.mxu0 %v185
  %444 = vmatprep.subr.mxu0 0.0
  %445 = vmatpush1.msra.mxu0 %v186
  %446 = vmatprep.subr.mxu0 0.0
  %447 = vmatpush1.msra.mxu0 %v187
  %448 = vmatprep.subr.mxu0 0.0
  %449 = vmatpush1.msra.mxu0 %v188
  %450 = vmatprep.subr.mxu0 0.0
  %451 = vmatpush1.msra.mxu0 %v189
  %452 = vmatprep.subr.mxu0 0.0
  %453 = vmatpush1.msra.mxu0 %v190
  %454 = vmatprep.subr.mxu0 0.0
  %455 = vmatpush1.msra.mxu0 %v191
  %456 = vmatprep.subr.mxu0 0.0
  %457 = vmatpush1.msra.mxu0 %v192
  %458 = vmatprep.subr.mxu0 0.0
  %459 = vmatpush1.msra.mxu0 %v193
  %460 = vmatprep.subr.mxu0 0.0
  %461 = vmatpush1.msra.mxu0 %v194
  %462 = vmatprep.subr.mxu0 0.0
  %463 = vmatpush1.msra.mxu0 %v195
  %464 = vmatprep.subr.mxu0 0.0
  %465 = vmatpush1.msra.mxu0 %v196
  %466 = vmatprep.subr.mxu0 0.0
  %467 = vmatpush1.msra.mxu0 %v197
  %468 = vmatprep.subr.mxu0 0.0
  %469 = vmatpush1.msra.mxu0 %v198
  %470 = vmatprep.subr.mxu0 0.0
  %471 = vmatpush1.msra.mxu0 %v199
  %472 = vmatprep.subr.mxu0 0.0
  %473 = vmatpush1.msra.mxu0 %v200
  %474 = vmatprep.subr.mxu0 0.0
  %475 = vmatpush1.msra.mxu0 %v201
  %476 = vmatprep.subr.mxu0 0.0
  %477 = vmatpush1.msra.mxu0 %v202
  %478 = vmatprep.subr.mxu0 0.0
  %479 = vmatpush1.msra.mxu0 %v203
  %480 = vmatprep.subr.mxu0 0.0
  %481 = vmatpush1.msra.mxu0 %v204
  %482 = vmatprep.subr.mxu0 0.0
  %483 = vmatpush1.msra.mxu0 %v205
  %484 = vmatprep.subr.mxu0 0.0
  %485 = vmatpush1.msra.mxu0 %v206
  %486 = vmatprep.subr.mxu0 0.0
  %487 = vmatpush1.msra.mxu0 %v207
  %488 = vmatprep.subr.mxu0 0.0
  %489 = vmatpush1.msra.mxu0 %v208
  %490 = vmatprep.mubr.f32.mxu0 %v80
  %491 = vmatmul.mubr.f32.gmra.mrb[0].mxu0 %v79
  %v492 = vpop.f32.mrb[0].mxu0
  %v493 = vadd.f32 %v423, %v492
  %v494 = vpop.f32.mrb[0].mxu0
  %495 = vdwg.mxu0
  %v496 = vld [vmem:[%s1] sm:$0xff]
  %v497 = vld [vmem:[%s1 + $0x8] sm:$0xff]
  %v498 = vld [vmem:[%s1 + $0x10] sm:$0xff]
  %v499 = vld [vmem:[%s1 + $0x18] sm:$0xff]
  %v500 = vld [vmem:[%s1 + $0x20] sm:$0xff]
  %v501 = vld [vmem:[%s1 + $0x28] sm:$0xff]
  %v502 = vld [vmem:[%s1 + $0x30] sm:$0xff]
  %v503 = vld [vmem:[%s1 + $0x38] sm:$0xff]
  %vm504 = vcmask 130048
  %v505 = vsel %vm504, %v496, 0.0
  %v506 = vrot.slane %v505, 4
  %v507 = vadd.f32 %v505, %v506
  %v508 = vrot.slane %v507, 2
  %v509 = vadd.f32 %v507, %v508
  %v510 = vrot.slane %v509, 1
  %v511 = vadd.f32 %v509, %v510
  %v512 = vsel %vm504, %v497, 0.0
  %v513 = vrot.slane %v512, 4
  %v514 = vadd.f32 %v512, %v513
  %v515 = vrot.slane %v514, 2
  %v516 = vadd.f32 %v514, %v515
  %v517 = vrot.slane %v516, 1
  %v518 = vadd.f32 %v516, %v517
  %v519 = vsel %vm504, %v498, 0.0
  %v520 = vrot.slane %v519, 4
  %v521 = vadd.f32 %v519, %v520
  %v522 = vrot.slane %v521, 2
  %v523 = vadd.f32 %v521, %v522
  %v524 = vrot.slane %v523, 1
  %v525 = vadd.f32 %v523, %v524
  %v526 = vsel %vm504, %v499, 0.0
  %v527 = vrot.slane %v526, 4
  %v528 = vadd.f32 %v526, %v527
  %v529 = vrot.slane %v528, 2
  %v530 = vadd.f32 %v528, %v529
  %v531 = vrot.slane %v530, 1
  %v532 = vadd.f32 %v530, %v531
  %v533 = vsel %vm504, %v500, 0.0
  %v534 = vrot.slane %v533, 4
  %v535 = vadd.f32 %v533, %v534
  %v536 = vrot.slane %v535, 2
  %v537 = vadd.f32 %v535, %v536
  %v538 = vrot.slane %v537, 1
  %v539 = vadd.f32 %v537, %v538
  %v540 = vsel %vm504, %v501, 0.0
  %v541 = vrot.slane %v540, 4
  %v542 = vadd.f32 %v540, %v541
  %v543 = vrot.slane %v542, 2
  %v544 = vadd.f32 %v542, %v543
  %v545 = vrot.slane %v544, 1
  %v546 = vadd.f32 %v544, %v545
  %v547 = vsel %vm504, %v502, 0.0
  %v548 = vrot.slane %v547, 4
  %v549 = vadd.f32 %v547, %v548
  %v550 = vrot.slane %v549, 2
  %v551 = vadd.f32 %v549, %v550
  %v552 = vrot.slane %v551, 1
  %v553 = vadd.f32 %v551, %v552
  %v554 = vsel %vm504, %v503, 0.0
  %v555 = vrot.slane %v554, 4
  %v556 = vadd.f32 %v554, %v555
  %v557 = vrot.slane %v556, 2
  %v558 = vadd.f32 %v556, %v557
  %v559 = vrot.slane %v558, 1
  %v560 = vadd.f32 %v558, %v559
  %v561 = vrcp.pop 8.0
  %v562 = vmul.f32 %v511, %v561
  %v563 = vmul.f32 %v518, %v561
  %v564 = vmul.f32 %v525, %v561
  %v565 = vmul.f32 %v532, %v561
  %v566 = vmul.f32 %v539, %v561
  %v567 = vmul.f32 %v546, %v561
  %v568 = vmul.f32 %v553, %v561
  %v569 = vmul.f32 %v560, %v561
  %v570 = vld [vmem:[%s5] sm:$0xff]
  %v571 = vld [vmem:[%s5 + $0x8] sm:$0xff]
  %v572 = vld [vmem:[%s6] sm:$0x1]
  %v574 = vlaneseq
  %v575 = vshrl.u32 %v574, 7
  %v576 = vsub.s32 0, %v575
  %v577 = vrot.slane %v572, %v576
  %vm587 = vcmask 1041409
  %v588 = vsel %vm587, %v563, %v562
  %vm589 = vcmask 1042434
  %v590 = vsel %vm589, %v564, %v588
  %vm591 = vcmask 1043459
  %v592 = vsel %vm591, %v565, %v590
  %vm593 = vcmask 1044484
  %v594 = vsel %vm593, %v566, %v592
  %vm595 = vcmask 1045509
  %v596 = vsel %vm595, %v567, %v594
  %vm597 = vcmask 1046534
  %v598 = vsel %vm597, %v568, %v596
  %vm599 = vcmask 1047559
  %v600 = vsel %vm599, %v569, %v598
  %v601 = vsel %vm504, %v600, 0
  %603 = vmatprep.subr.mxu0 0.0
  %604 = vmatpush1.msra.mxu0 %v570
  %605 = vmatprep.subr.mxu0 0.0
  %606 = vmatpush1.msra.mxu0 %v571
  %607 = vmatprep.subr.mxu0 0.0
  %608 = vmatpush1.msra.mxu0 0.0
  %609 = vmatprep.subr.mxu0 0.0
  %610 = vmatpush1.msra.mxu0 0.0
  %611 = vmatprep.subr.mxu0 0.0
  %612 = vmatpush1.msra.mxu0 0.0
  %613 = vmatprep.subr.mxu0 0.0
  %614 = vmatpush1.msra.mxu0 0.0
  %615 = vmatprep.subr.mxu0 0.0
  %616 = vmatpush1.msra.mxu0 0.0
  %617 = vmatprep.subr.mxu0 0.0
  %618 = vmatpush1.msra.mxu0 0.0
  %619 = vmatprep.subr.mxu0 0.0
  %620 = vmatpush1.msra.mxu0 0.0
  %621 = vmatprep.subr.mxu0 0.0
  %622 = vmatpush1.msra.mxu0 0.0
  %623 = vmatprep.subr.mxu0 0.0
  %624 = vmatpush1.msra.mxu0 0.0
  %625 = vmatprep.subr.mxu0 0.0
  %626 = vmatpush1.msra.mxu0 0.0
  %627 = vmatprep.subr.mxu0 0.0
  %628 = vmatpush1.msra.mxu0 0.0
  %629 = vmatprep.subr.mxu0 0.0
  %630 = vmatpush1.msra.mxu0 0.0
  %631 = vmatprep.subr.mxu0 0.0
  %632 = vmatpush1.msra.mxu0 0.0
  %633 = vmatprep.subr.mxu0 0.0
  %634 = vmatpush1.msra.mxu0 0.0
  %635 = vmatprep.subr.mxu0 0.0
  %636 = vmatpush1.msra.mxu0 0.0
  %637 = vmatprep.subr.mxu0 0.0
  %638 = vmatpush1.msra.mxu0 0.0
  %639 = vmatprep.subr.mxu0 0.0
  %640 = vmatpush1.msra.mxu0 0.0
  %641 = vmatprep.subr.mxu0 0.0
  %642 = vmatpush1.msra.mxu0 0.0
  %643 = vmatprep.subr.mxu0 0.0
  %644 = vmatpush1.msra.mxu0 0.0
  %645 = vmatprep.subr.mxu0 0.0
  %646 = vmatpush1.msra.mxu0 0.0
  %647 = vmatprep.subr.mxu0 0.0
  %648 = vmatpush1.msra.mxu0 0.0
  %649 = vmatprep.subr.mxu0 0.0
  %650 = vmatpush1.msra.mxu0 0.0
  %651 = vmatprep.subr.mxu0 0.0
  %652 = vmatpush1.msra.mxu0 0.0
  %653 = vmatprep.subr.mxu0 0.0
  %654 = vmatpush1.msra.mxu0 0.0
  %655 = vmatprep.subr.mxu0 0.0
  %656 = vmatpush1.msra.mxu0 0.0
  %657 = vmatprep.subr.mxu0 0.0
  %658 = vmatpush1.msra.mxu0 0.0
  %659 = vmatprep.subr.mxu0 0.0
  %660 = vmatpush1.msra.mxu0 0.0
  %661 = vmatprep.subr.mxu0 0.0
  %662 = vmatpush1.msra.mxu0 0.0
  %663 = vmatprep.subr.mxu0 0.0
  %664 = vmatpush1.msra.mxu0 0.0
  %665 = vmatprep.subr.mxu0 0.0
  %666 = vmatpush1.msra.mxu0 0.0
  %667 = vmatprep.mubr.f32.mxu0 0.0
  %668 = vmatmul.mubr.f32.gmra.mrb[0].mxu0 %v601
  %v669 = vpop.f32.mrb[0].mxu0
  %v670 = vadd.f32 %v577, %v669
  %v671 = vpop.f32.mrb[0].mxu0
  %672 = vdwg.mxu0
  %v673 = vld [vmem:[%s7] sm:$0xff]
  %v674 = vld [vmem:[%s7 + $0x8] sm:$0xff]
  %v675 = vld [vmem:[%s7 + $0x10] sm:$0xff]
  %v676 = vld [vmem:[%s7 + $0x18] sm:$0xff]
  %v677 = vld [vmem:[%s7 + $0x20] sm:$0xff]
  %v678 = vld [vmem:[%s7 + $0x28] sm:$0xff]
  %v679 = vld [vmem:[%s7 + $0x30] sm:$0xff]
  %v680 = vld [vmem:[%s7 + $0x38] sm:$0xff]
  %v681 = vld [vmem:[%s8] sm:$0xff]
  %v682 = vld [vmem:[%s8 + $0x8] sm:$0xff]
  %v683 = vld [vmem:[%s8 + $0x10] sm:$0xff]
  %v684 = vld [vmem:[%s8 + $0x18] sm:$0xff]
  %vm685 = vcmask 261120
  %v687 = vsel %vm685, %v670, 0
  %689 = vmatprep.subr.mxu0 0.0
  %690 = vmatpush1.msra.mxu0 %v681
  %691 = vmatprep.subr.mxu0 0.0
  %692 = vmatpush1.msra.mxu0 %v682
  %693 = vmatprep.subr.mxu0 0.0
  %694 = vmatpush1.msra.mxu0 %v683
  %695 = vmatprep.subr.mxu0 0.0
  %696 = vmatpush1.msra.mxu0 %v684
  %697 = vmatprep.subr.mxu0 0.0
  %698 = vmatpush1.msra.mxu0 0.0
  %699 = vmatprep.subr.mxu0 0.0
  %700 = vmatpush1.msra.mxu0 0.0
  %701 = vmatprep.subr.mxu0 0.0
  %702 = vmatpush1.msra.mxu0 0.0
  %703 = vmatprep.subr.mxu0 0.0
  %704 = vmatpush1.msra.mxu0 0.0
  %705 = vmatprep.subr.mxu0 0.0
  %706 = vmatpush1.msra.mxu0 0.0
  %707 = vmatprep.subr.mxu0 0.0
  %708 = vmatpush1.msra.mxu0 0.0
  %709 = vmatprep.subr.mxu0 0.0
  %710 = vmatpush1.msra.mxu0 0.0
  %711 = vmatprep.subr.mxu0 0.0
  %712 = vmatpush1.msra.mxu0 0.0
  %713 = vmatprep.subr.mxu0 0.0
  %714 = vmatpush1.msra.mxu0 0.0
  %715 = vmatprep.subr.mxu0 0.0
  %716 = vmatpush1.msra.mxu0 0.0
  %717 = vmatprep.subr.mxu0 0.0
  %718 = vmatpush1.msra.mxu0 0.0
  %719 = vmatprep.subr.mxu0 0.0
  %720 = vmatpush1.msra.mxu0 0.0
  %721 = vmatprep.subr.mxu0 0.0
  %722 = vmatpush1.msra.mxu0 0.0
  %723 = vmatprep.subr.mxu0 0.0
  %724 = vmatpush1.msra.mxu0 0.0
  %725 = vmatprep.subr.mxu0 0.0
  %726 = vmatpush1.msra.mxu0 0.0
  %727 = vmatprep.subr.mxu0 0.0
  %728 = vmatpush1.msra.mxu0 0.0
  %729 = vmatprep.subr.mxu0 0.0
  %730 = vmatpush1.msra.mxu0 0.0
  %731 = vmatprep.subr.mxu0 0.0
  %732 = vmatpush1.msra.mxu0 0.0
  %733 = vmatprep.subr.mxu0 0.0
  %734 = vmatpush1.msra.mxu0 0.0
  %735 = vmatprep.subr.mxu0 0.0
  %736 = vmatpush1.msra.mxu0 0.0
  %737 = vmatprep.subr.mxu0 0.0
  %738 = vmatpush1.msra.mxu0 0.0
  %739 = vmatprep.subr.mxu0 0.0
  %740 = vmatpush1.msra.mxu0 0.0
  %741 = vmatprep.subr.mxu0 0.0
  %742 = vmatpush1.msra.mxu0 0.0
  %743 = vmatprep.subr.mxu0 0.0
  %744 = vmatpush1.msra.mxu0 0.0
  %745 = vmatprep.subr.mxu0 0.0
  %746 = vmatpush1.msra.mxu0 0.0
  %747 = vmatprep.subr.mxu0 0.0
  %748 = vmatpush1.msra.mxu0 0.0
  %749 = vmatprep.subr.mxu0 0.0
  %750 = vmatpush1.msra.mxu0 0.0
  %751 = vmatprep.subr.mxu0 0.0
  %752 = vmatpush1.msra.mxu0 0.0
  %753 = vmatprep.mubr.f32.mxu0 0.0
  %754 = vmatmul.mubr.f32.gmra.mrb[0].mxu0 %v687
  %v755 = vpop.f32.mrb[0].mxu0
  %v756 = vadd.f32 0.0, %v755
  %v757 = vpop.f32.mrb[0].mxu0
  %758 = vdwg.mxu0
  %vm759 = vcmask 523264
  %v761 = vsel %vm759, %v493, 0
  %763 = vmatprep.subr.mxu0 0.0
  %764 = vmatpush1.msra.mxu0 %v673
  %765 = vmatprep.subr.mxu0 0.0
  %766 = vmatpush1.msra.mxu0 %v674
  %767 = vmatprep.subr.mxu0 0.0
  %768 = vmatpush1.msra.mxu0 %v675
  %769 = vmatprep.subr.mxu0 0.0
  %770 = vmatpush1.msra.mxu0 %v676
  %771 = vmatprep.subr.mxu0 0.0
  %772 = vmatpush1.msra.mxu0 %v677
  %773 = vmatprep.subr.mxu0 0.0
  %774 = vmatpush1.msra.mxu0 %v678
  %775 = vmatprep.subr.mxu0 0.0
  %776 = vmatpush1.msra.mxu0 %v679
  %777 = vmatprep.subr.mxu0 0.0
  %778 = vmatpush1.msra.mxu0 %v680
  %779 = vmatprep.subr.mxu0 0.0
  %780 = vmatpush1.msra.mxu0 0.0
  %781 = vmatprep.subr.mxu0 0.0
  %782 = vmatpush1.msra.mxu0 0.0
  %783 = vmatprep.subr.mxu0 0.0
  %784 = vmatpush1.msra.mxu0 0.0
  %785 = vmatprep.subr.mxu0 0.0
  %786 = vmatpush1.msra.mxu0 0.0
  %787 = vmatprep.subr.mxu0 0.0
  %788 = vmatpush1.msra.mxu0 0.0
  %789 = vmatprep.subr.mxu0 0.0
  %790 = vmatpush1.msra.mxu0 0.0
  %791 = vmatprep.subr.mxu0 0.0
  %792 = vmatpush1.msra.mxu0 0.0
  %793 = vmatprep.subr.mxu0 0.0
  %794 = vmatpush1.msra.mxu0 0.0
  %795 = vmatprep.subr.mxu0 0.0
  %796 = vmatpush1.msra.mxu0 0.0
  %797 = vmatprep.subr.mxu0 0.0
  %798 = vmatpush1.msra.mxu0 0.0
  %799 = vmatprep.subr.mxu0 0.0
  %800 = vmatpush1.msra.mxu0 0.0
  %801 = vmatprep.subr.mxu0 0.0
  %802 = vmatpush1.msra.mxu0 0.0
  %803 = vmatprep.subr.mxu0 0.0
  %804 = vmatpush1.msra.mxu0 0.0
  %805 = vmatprep.subr.mxu0 0.0
  %806 = vmatpush1.msra.mxu0 0.0
  %807 = vmatprep.subr.mxu0 0.0
  %808 = vmatpush1.msra.mxu0 0.0
  %809 = vmatprep.subr.mxu0 0.0
  %810 = vmatpush1.msra.mxu0 0.0
  %811 = vmatprep.subr.mxu0 0.0
  %812 = vmatpush1.msra.mxu0 0.0
  %813 = vmatprep.subr.mxu0 0.0
  %814 = vmatpush1.msra.mxu0 0.0
  %815 = vmatprep.subr.mxu0 0.0
  %816 = vmatpush1.msra.mxu0 0.0
  %817 = vmatprep.subr.mxu0 0.0
  %818 = vmatpush1.msra.mxu0 0.0
  %819 = vmatprep.subr.mxu0 0.0
  %820 = vmatpush1.msra.mxu0 0.0
  %821 = vmatprep.subr.mxu0 0.0
  %822 = vmatpush1.msra.mxu0 0.0
  %823 = vmatprep.subr.mxu0 0.0
  %824 = vmatpush1.msra.mxu0 0.0
  %825 = vmatprep.subr.mxu0 0.0
  %826 = vmatpush1.msra.mxu0 0.0
  %827 = vmatprep.mubr.f32.mxu0 0.0
  %828 = vmatmul.mubr.f32.gmra.mrb[0].mxu0 %v761
  %v829 = vpop.f32.mrb[0].mxu0
  %v830 = vadd.f32 %v756, %v829
  %v831 = vpop.f32.mrb[0].mxu0
  %832 = vdwg.mxu0
  %v833 = vld [vmem:[%s9] sm:$0x1]
  %v835 = vlaneseq
  %v836 = vshrl.u32 %v835, 7
  %v837 = vsub.s32 0, %v836
  %v838 = vrot.slane %v833, %v837
  %v840 = vadd.f32 %v830, %v838
  %v841 = vmax.f32 %v840, 0.0
  %v842 = vld [vmem:[%s10] sm:$0xff]
  %v843 = vld [vmem:[%s10 + $0x8] sm:$0xff]
  %v844 = vld [vmem:[%s10 + $0x10] sm:$0xff]
  %v845 = vld [vmem:[%s10 + $0x18] sm:$0xff]
  %v846 = vld [vmem:[%s10 + $0x20] sm:$0xff]
  %v847 = vld [vmem:[%s10 + $0x28] sm:$0xff]
  %v848 = vld [vmem:[%s10 + $0x30] sm:$0xff]
  %v849 = vld [vmem:[%s10 + $0x38] sm:$0xff]
  %v850 = vld [vmem:[%s11] sm:$0x1]
  %v852 = vlaneseq
  %v853 = vshrl.u32 %v852, 7
  %v854 = vsub.s32 0, %v853
  %v855 = vrot.slane %v850, %v854
  %v858 = vsel %vm759, %v841, 0
  %860 = vmatprep.subr.mxu0 0.0
  %861 = vmatpush1.msra.mxu0 %v842
  %862 = vmatprep.subr.mxu0 0.0
  %863 = vmatpush1.msra.mxu0 %v843
  %864 = vmatprep.subr.mxu0 0.0
  %865 = vmatpush1.msra.mxu0 %v844
  %866 = vmatprep.subr.mxu0 0.0
  %867 = vmatpush1.msra.mxu0 %v845
  %868 = vmatprep.subr.mxu0 0.0
  %869 = vmatpush1.msra.mxu0 %v846
  %870 = vmatprep.subr.mxu0 0.0
  %871 = vmatpush1.msra.mxu0 %v847
  %872 = vmatprep.subr.mxu0 0.0
  %873 = vmatpush1.msra.mxu0 %v848
  %874 = vmatprep.subr.mxu0 0.0
  %875 = vmatpush1.msra.mxu0 %v849
  %876 = vmatprep.subr.mxu0 0.0
  %877 = vmatpush1.msra.mxu0 0.0
  %878 = vmatprep.subr.mxu0 0.0
  %879 = vmatpush1.msra.mxu0 0.0
  %880 = vmatprep.subr.mxu0 0.0
  %881 = vmatpush1.msra.mxu0 0.0
  %882 = vmatprep.subr.mxu0 0.0
  %883 = vmatpush1.msra.mxu0 0.0
  %884 = vmatprep.subr.mxu0 0.0
  %885 = vmatpush1.msra.mxu0 0.0
  %886 = vmatprep.subr.mxu0 0.0
  %887 = vmatpush1.msra.mxu0 0.0
  %888 = vmatprep.subr.mxu0 0.0
  %889 = vmatpush1.msra.mxu0 0.0
  %890 = vmatprep.subr.mxu0 0.0
  %891 = vmatpush1.msra.mxu0 0.0
  %892 = vmatprep.subr.mxu0 0.0
  %893 = vmatpush1.msra.mxu0 0.0
  %894 = vmatprep.subr.mxu0 0.0
  %895 = vmatpush1.msra.mxu0 0.0
  %896 = vmatprep.subr.mxu0 0.0
  %897 = vmatpush1.msra.mxu0 0.0
  %898 = vmatprep.subr.mxu0 0.0
  %899 = vmatpush1.msra.mxu0 0.0
  %900 = vmatprep.subr.mxu0 0.0
  %901 = vmatpush1.msra.mxu0 0.0
  %902 = vmatprep.subr.mxu0 0.0
  %903 = vmatpush1.msra.mxu0 0.0
  %904 = vmatprep.subr.mxu0 0.0
  %905 = vmatpush1.msra.mxu0 0.0
  %906 = vmatprep.subr.mxu0 0.0
  %907 = vmatpush1.msra.mxu0 0.0
  %908 = vmatprep.subr.mxu0 0.0
  %909 = vmatpush1.msra.mxu0 0.0
  %910 = vmatprep.subr.mxu0 0.0
  %911 = vmatpush1.msra.mxu0 0.0
  %912 = vmatprep.subr.mxu0 0.0
  %913 = vmatpush1.msra.mxu0 0.0
  %914 = vmatprep.subr.mxu0 0.0
  %915 = vmatpush1.msra.mxu0 0.0
  %916 = vmatprep.subr.mxu0 0.0
  %917 = vmatpush1.msra.mxu0 0.0
  %918 = vmatprep.subr.mxu0 0.0
  %919 = vmatpush1.msra.mxu0 0.0
  %920 = vmatprep.subr.mxu0 0.0
  %921 = vmatpush1.msra.mxu0 0.0
  %922 = vmatprep.subr.mxu0 0.0
  %923 = vmatpush1.msra.mxu0 0.0
  %924 = vmatprep.mubr.f32.mxu0 0.0
  %925 = vmatmul.mubr.f32.gmra.mrb[0].mxu0 %v858
  %v926 = vpop.f32.mrb[0].mxu0
  %v927 = vadd.f32 %v855, %v926
  %v928 = vpop.f32.mrb[0].mxu0
  %929 = vdwg.mxu0
  %v930 = vld [vmem:[%s12] sm:$0xff]
  %v931 = vld [vmem:[%s12 + $0x8] sm:$0xff]
  %v932 = vld [vmem:[%s12 + $0x10] sm:$0xff]
  %v933 = vld [vmem:[%s12 + $0x18] sm:$0xff]
  %v934 = vld [vmem:[%s12 + $0x20] sm:$0xff]
  %v935 = vld [vmem:[%s12 + $0x28] sm:$0xff]
  %v936 = vld [vmem:[%s12 + $0x30] sm:$0xff]
  %v937 = vld [vmem:[%s12 + $0x38] sm:$0xff]
  %v938 = vld [vmem:[%s13] sm:$0x1]
  %v940 = vlaneseq
  %v941 = vshrl.u32 %v940, 7
  %v942 = vsub.s32 0, %v941
  %v943 = vrot.slane %v938, %v942
  %945 = vmatprep.subr.mxu0 0.0
  %946 = vmatpush1.msra.mxu0 %v930
  %947 = vmatprep.subr.mxu0 0.0
  %948 = vmatpush1.msra.mxu0 %v931
  %949 = vmatprep.subr.mxu0 0.0
  %950 = vmatpush1.msra.mxu0 %v932
  %951 = vmatprep.subr.mxu0 0.0
  %952 = vmatpush1.msra.mxu0 %v933
  %953 = vmatprep.subr.mxu0 0.0
  %954 = vmatpush1.msra.mxu0 %v934
  %955 = vmatprep.subr.mxu0 0.0
  %956 = vmatpush1.msra.mxu0 %v935
  %957 = vmatprep.subr.mxu0 0.0
  %958 = vmatpush1.msra.mxu0 %v936
  %959 = vmatprep.subr.mxu0 0.0
  %960 = vmatpush1.msra.mxu0 %v937
  %961 = vmatprep.subr.mxu0 0.0
  %962 = vmatpush1.msra.mxu0 0.0
  %963 = vmatprep.subr.mxu0 0.0
  %964 = vmatpush1.msra.mxu0 0.0
  %965 = vmatprep.subr.mxu0 0.0
  %966 = vmatpush1.msra.mxu0 0.0
  %967 = vmatprep.subr.mxu0 0.0
  %968 = vmatpush1.msra.mxu0 0.0
  %969 = vmatprep.subr.mxu0 0.0
  %970 = vmatpush1.msra.mxu0 0.0
  %971 = vmatprep.subr.mxu0 0.0
  %972 = vmatpush1.msra.mxu0 0.0
  %973 = vmatprep.subr.mxu0 0.0
  %974 = vmatpush1.msra.mxu0 0.0
  %975 = vmatprep.subr.mxu0 0.0
  %976 = vmatpush1.msra.mxu0 0.0
  %977 = vmatprep.subr.mxu0 0.0
  %978 = vmatpush1.msra.mxu0 0.0
  %979 = vmatprep.subr.mxu0 0.0
  %980 = vmatpush1.msra.mxu0 0.0
  %981 = vmatprep.subr.mxu0 0.0
  %982 = vmatpush1.msra.mxu0 0.0
  %983 = vmatprep.subr.mxu0 0.0
  %984 = vmatpush1.msra.mxu0 0.0
  %985 = vmatprep.subr.mxu0 0.0
  %986 = vmatpush1.msra.mxu0 0.0
  %987 = vmatprep.subr.mxu0 0.0
  %988 = vmatpush1.msra.mxu0 0.0
  %989 = vmatprep.subr.mxu0 0.0
  %990 = vmatpush1.msra.mxu0 0.0
  %991 = vmatprep.subr.mxu0 0.0
  %992 = vmatpush1.msra.mxu0 0.0
  %993 = vmatprep.subr.mxu0 0.0
  %994 = vmatpush1.msra.mxu0 0.0
  %995 = vmatprep.subr.mxu0 0.0
  %996 = vmatpush1.msra.mxu0 0.0
  %997 = vmatprep.subr.mxu0 0.0
  %998 = vmatpush1.msra.mxu0 0.0
  %999 = vmatprep.subr.mxu0 0.0
  %1000 = vmatpush1.msra.mxu0 0.0
  %1001 = vmatprep.subr.mxu0 0.0
  %1002 = vmatpush1.msra.mxu0 0.0
  %1003 = vmatprep.subr.mxu0 0.0
  %1004 = vmatpush1.msra.mxu0 0.0
  %1005 = vmatprep.subr.mxu0 0.0
  %1006 = vmatpush1.msra.mxu0 0.0
  %1007 = vmatprep.subr.mxu0 0.0
  %1008 = vmatpush1.msra.mxu0 0.0
  %1009 = vmatprep.mubr.f32.mxu0 0.0
  %1010 = vmatmul.mubr.f32.gmra.mrb[0].mxu0 %v858
  %v1011 = vpop.f32.mrb[0].mxu0
  %v1012 = vadd.f32 %v943, %v1011
  %v1013 = vpop.f32.mrb[0].mxu0
  %1014 = vdwg.mxu0
  %v1015 = vmul.f32 %v1012, 1.442695
  %v1016 = vpow.pop %v1015
  %v1017 = vld [vmem:[%s2] sm:$0xff]
  %v1018 = vmul.f32 %v1016, %v1017
  %v1019 = vadd.f32 %v927, %v1018
  %v1020 = vld [vmem:[%s14] sm:$0xff]
  %v1021 = vld [vmem:[%s14 + $0x8] sm:$0xff]
  %v1022 = vld [vmem:[%s15] sm:$0x1]
  %v1024 = vlaneseq
  %v1025 = vshrl.u32 %v1024, 7
  %v1026 = vsub.s32 0, %v1025
  %v1027 = vrot.slane %v1022, %v1026
  %v1030 = vsel %vm504, %v1019, 0
  %1032 = vmatprep.subr.mxu0 0.0
  %1033 = vmatpush1.msra.mxu0 %v1020
  %1034 = vmatprep.subr.mxu0 0.0
  %1035 = vmatpush1.msra.mxu0 %v1021
  %1036 = vmatprep.subr.mxu0 0.0
  %1037 = vmatpush1.msra.mxu0 0.0
  %1038 = vmatprep.subr.mxu0 0.0
  %1039 = vmatpush1.msra.mxu0 0.0
  %1040 = vmatprep.subr.mxu0 0.0
  %1041 = vmatpush1.msra.mxu0 0.0
  %1042 = vmatprep.subr.mxu0 0.0
  %1043 = vmatpush1.msra.mxu0 0.0
  %1044 = vmatprep.subr.mxu0 0.0
  %1045 = vmatpush1.msra.mxu0 0.0
  %1046 = vmatprep.subr.mxu0 0.0
  %1047 = vmatpush1.msra.mxu0 0.0
  %1048 = vmatprep.subr.mxu0 0.0
  %1049 = vmatpush1.msra.mxu0 0.0
  %1050 = vmatprep.subr.mxu0 0.0
  %1051 = vmatpush1.msra.mxu0 0.0
  %1052 = vmatprep.subr.mxu0 0.0
  %1053 = vmatpush1.msra.mxu0 0.0
  %1054 = vmatprep.subr.mxu0 0.0
  %1055 = vmatpush1.msra.mxu0 0.0
  %1056 = vmatprep.subr.mxu0 0.0
  %1057 = vmatpush1.msra.mxu0 0.0
  %1058 = vmatprep.subr.mxu0 0.0
  %1059 = vmatpush1.msra.mxu0 0.0
  %1060 = vmatprep.subr.mxu0 0.0
  %1061 = vmatpush1.msra.mxu0 0.0
  %1062 = vmatprep.subr.mxu0 0.0
  %1063 = vmatpush1.msra.mxu0 0.0
  %1064 = vmatprep.subr.mxu0 0.0
  %1065 = vmatpush1.msra.mxu0 0.0
  %1066 = vmatprep.subr.mxu0 0.0
  %1067 = vmatpush1.msra.mxu0 0.0
  %1068 = vmatprep.subr.mxu0 0.0
  %1069 = vmatpush1.msra.mxu0 0.0
  %1070 = vmatprep.subr.mxu0 0.0
  %1071 = vmatpush1.msra.mxu0 0.0
  %1072 = vmatprep.subr.mxu0 0.0
  %1073 = vmatpush1.msra.mxu0 0.0
  %1074 = vmatprep.subr.mxu0 0.0
  %1075 = vmatpush1.msra.mxu0 0.0
  %1076 = vmatprep.subr.mxu0 0.0
  %1077 = vmatpush1.msra.mxu0 0.0
  %1078 = vmatprep.subr.mxu0 0.0
  %1079 = vmatpush1.msra.mxu0 0.0
  %1080 = vmatprep.subr.mxu0 0.0
  %1081 = vmatpush1.msra.mxu0 0.0
  %1082 = vmatprep.subr.mxu0 0.0
  %1083 = vmatpush1.msra.mxu0 0.0
  %1084 = vmatprep.subr.mxu0 0.0
  %1085 = vmatpush1.msra.mxu0 0.0
  %1086 = vmatprep.subr.mxu0 0.0
  %1087 = vmatpush1.msra.mxu0 0.0
  %1088 = vmatprep.subr.mxu0 0.0
  %1089 = vmatpush1.msra.mxu0 0.0
  %1090 = vmatprep.subr.mxu0 0.0
  %1091 = vmatpush1.msra.mxu0 0.0
  %1092 = vmatprep.subr.mxu0 0.0
  %1093 = vmatpush1.msra.mxu0 0.0
  %1094 = vmatprep.subr.mxu0 0.0
  %1095 = vmatpush1.msra.mxu0 0.0
  %1096 = vmatprep.mubr.f32.mxu0 0.0
  %1097 = vmatmul.mubr.f32.gmra.mrb[0].mxu0 %v1030
  %v1098 = vpop.f32.mrb[0].mxu0
  %v1099 = vadd.f32 %v1027, %v1098
  %v1100 = vpop.f32.mrb[0].mxu0
  %1101 = vdwg.mxu0
  %v1102 = vmax.f32 %v1099, 0.0
  %v1103 = vld [vmem:[%s16] sm:$0xff]
  %v1104 = vld [vmem:[%s16 + $0x8] sm:$0xff]
  %v1105 = vld [vmem:[%s16 + $0x10] sm:$0xff]
  %v1106 = vld [vmem:[%s16 + $0x18] sm:$0xff]
  %v1107 = vld [vmem:[%s16 + $0x20] sm:$0xff]
  %v1108 = vld [vmem:[%s16 + $0x28] sm:$0xff]
  %v1109 = vld [vmem:[%s16 + $0x30] sm:$0xff]
  %v1110 = vld [vmem:[%s16 + $0x38] sm:$0xff]
  %v1111 = vld [vmem:[%s16 + $0x40] sm:$0xff]
  %v1112 = vld [vmem:[%s16 + $0x48] sm:$0xff]
  %v1113 = vld [vmem:[%s16 + $0x50] sm:$0xff]
  %v1114 = vld [vmem:[%s16 + $0x58] sm:$0xff]
  %v1115 = vld [vmem:[%s16 + $0x60] sm:$0xff]
  %v1116 = vld [vmem:[%s16 + $0x68] sm:$0xff]
  %v1117 = vld [vmem:[%s16 + $0x70] sm:$0xff]
  %v1118 = vld [vmem:[%s16 + $0x78] sm:$0xff]
  %v1119 = vld [vmem:[%s16 + $0x80] sm:$0xff]
  %v1120 = vld [vmem:[%s16 + $0x88] sm:$0xff]
  %v1121 = vld [vmem:[%s16 + $0x90] sm:$0xff]
  %v1122 = vld [vmem:[%s16 + $0x98] sm:$0xff]
  %v1123 = vld [vmem:[%s16 + $0xa0] sm:$0xff]
  %v1124 = vld [vmem:[%s16 + $0xa8] sm:$0xff]
  %v1125 = vld [vmem:[%s16 + $0xb0] sm:$0xff]
  %v1126 = vld [vmem:[%s16 + $0xb8] sm:$0xff]
  %v1127 = vld [vmem:[%s16 + $0xc0] sm:$0xff]
  %v1128 = vld [vmem:[%s16 + $0xc8] sm:$0xff]
  %v1129 = vld [vmem:[%s16 + $0xd0] sm:$0xff]
  %v1130 = vld [vmem:[%s16 + $0xd8] sm:$0xff]
  %v1131 = vld [vmem:[%s16 + $0xe0] sm:$0xff]
  %v1132 = vld [vmem:[%s16 + $0xe8] sm:$0xff]
  %v1133 = vld [vmem:[%s16 + $0xf0] sm:$0xff]
  %v1134 = vld [vmem:[%s16 + $0xf8] sm:$0xff]
  %v1135 = vld [vmem:[%s16 + $0x100] sm:$0xff]
  %v1136 = vld [vmem:[%s16 + $0x108] sm:$0xff]
  %v1137 = vld [vmem:[%s16 + $0x110] sm:$0xff]
  %v1138 = vld [vmem:[%s16 + $0x118] sm:$0xff]
  %v1139 = vld [vmem:[%s16 + $0x120] sm:$0xff]
  %v1140 = vld [vmem:[%s16 + $0x128] sm:$0xff]
  %v1141 = vld [vmem:[%s16 + $0x130] sm:$0xff]
  %v1142 = vld [vmem:[%s16 + $0x138] sm:$0xff]
  %v1143 = vld [vmem:[%s16 + $0x140] sm:$0xff]
  %v1144 = vld [vmem:[%s16 + $0x148] sm:$0xff]
  %v1145 = vld [vmem:[%s16 + $0x150] sm:$0xff]
  %v1146 = vld [vmem:[%s16 + $0x158] sm:$0xff]
  %v1147 = vld [vmem:[%s16 + $0x160] sm:$0xff]
  %v1148 = vld [vmem:[%s16 + $0x168] sm:$0xff]
  %v1149 = vld [vmem:[%s16 + $0x170] sm:$0xff]
  %v1150 = vld [vmem:[%s16 + $0x178] sm:$0xff]
  %v1151 = vld [vmem:[%s16 + $0x180] sm:$0xff]
  %v1152 = vld [vmem:[%s16 + $0x188] sm:$0xff]
  %v1153 = vld [vmem:[%s16 + $0x190] sm:$0xff]
  %v1154 = vld [vmem:[%s16 + $0x198] sm:$0xff]
  %v1155 = vld [vmem:[%s16 + $0x1a0] sm:$0xff]
  %v1156 = vld [vmem:[%s16 + $0x1a8] sm:$0xff]
  %v1157 = vld [vmem:[%s16 + $0x1b0] sm:$0xff]
  %v1158 = vld [vmem:[%s16 + $0x1b8] sm:$0xff]
  %v1159 = vld [vmem:[%s16 + $0x1c0] sm:$0xff]
  %v1160 = vld [vmem:[%s16 + $0x1c8] sm:$0xff]
  %v1161 = vld [vmem:[%s16 + $0x1d0] sm:$0xff]
  %v1162 = vld [vmem:[%s16 + $0x1d8] sm:$0xff]
  %v1163 = vld [vmem:[%s16 + $0x1e0] sm:$0xff]
  %v1164 = vld [vmem:[%s16 + $0x1e8] sm:$0xff]
  %v1165 = vld [vmem:[%s16 + $0x1f0] sm:$0xff]
  %v1166 = vld [vmem:[%s16 + $0x1f8] sm:$0xff]
  %v1167 = vld [vmem:[%s17] sm:$0xff]
  %v1169 = vlaneseq
  %v1170 = vshrl.u32 %v1169, 7
  %v1171 = vsub.s32 0, %v1170
  %v1172 = vrot.slane %v1167, %v1171
  %v1173 = vlaneseq
  %v1174 = vshrl.u32 %v1173, 7
  %v1175 = vsub.s32 1, %v1174
  %v1176 = vrot.slane %v1167, %v1175
  %v1177 = vlaneseq
  %v1178 = vshrl.u32 %v1177, 7
  %v1179 = vsub.s32 2, %v1178
  %v1180 = vrot.slane %v1167, %v1179
  %v1181 = vlaneseq
  %v1182 = vshrl.u32 %v1181, 7
  %v1183 = vsub.s32 3, %v1182
  %v1184 = vrot.slane %v1167, %v1183
  %v1185 = vlaneseq
  %v1186 = vshrl.u32 %v1185, 7
  %v1187 = vsub.s32 4, %v1186
  %v1188 = vrot.slane %v1167, %v1187
  %v1189 = vlaneseq
  %v1190 = vshrl.u32 %v1189, 7
  %v1191 = vsub.s32 5, %v1190
  %v1192 = vrot.slane %v1167, %v1191
  %v1193 = vlaneseq
  %v1194 = vshrl.u32 %v1193, 7
  %v1195 = vsub.s32 6, %v1194
  %v1196 = vrot.slane %v1167, %v1195
  %v1197 = vlaneseq
  %v1198 = vshrl.u32 %v1197, 7
  %v1199 = vsub.s32 7, %v1198
  %v1200 = vrot.slane %v1167, %v1199
  %v1210 = vsel %vm759, %v1102, 0
  %1212 = vmatprep.subr.mxu0 %v1104
  %1213 = vmatpush1.msra.mxu0 %v1103
  %1214 = vmatprep.subr.mxu0 %v1112
  %1215 = vmatpush1.msra.mxu0 %v1111
  %1216 = vmatprep.subr.mxu0 %v1120
  %1217 = vmatpush1.msra.mxu0 %v1119
  %1218 = vmatprep.subr.mxu0 %v1128
  %1219 = vmatpush1.msra.mxu0 %v1127
  %1220 = vmatprep.subr.mxu0 %v1136
  %1221 = vmatpush1.msra.mxu0 %v1135
  %1222 = vmatprep.subr.mxu0 %v1144
  %1223 = vmatpush1.msra.mxu0 %v1143
  %1224 = vmatprep.subr.mxu0 %v1152
  %1225 = vmatpush1.msra.mxu0 %v1151
  %1226 = vmatprep.subr.mxu0 %v1160
  %1227 = vmatpush1.msra.mxu0 %v1159
  %1228 = vmatprep.subr.mxu0 0.0
  %1229 = vmatpush1.msra.mxu0 0.0
  %1230 = vmatprep.subr.mxu0 0.0
  %1231 = vmatpush1.msra.mxu0 0.0
  %1232 = vmatprep.subr.mxu0 0.0
  %1233 = vmatpush1.msra.mxu0 0.0
  %1234 = vmatprep.subr.mxu0 0.0
  %1235 = vmatpush1.msra.mxu0 0.0
  %1236 = vmatprep.subr.mxu0 0.0
  %1237 = vmatpush1.msra.mxu0 0.0
  %1238 = vmatprep.subr.mxu0 0.0
  %1239 = vmatpush1.msra.mxu0 0.0
  %1240 = vmatprep.subr.mxu0 0.0
  %1241 = vmatpush1.msra.mxu0 0.0
  %1242 = vmatprep.subr.mxu0 0.0
  %1243 = vmatpush1.msra.mxu0 0.0
  %1244 = vmatprep.subr.mxu0 0.0
  %1245 = vmatpush1.msra.mxu0 0.0
  %1246 = vmatprep.subr.mxu0 0.0
  %1247 = vmatpush1.msra.mxu0 0.0
  %1248 = vmatprep.subr.mxu0 0.0
  %1249 = vmatpush1.msra.mxu0 0.0
  %1250 = vmatprep.subr.mxu0 0.0
  %1251 = vmatpush1.msra.mxu0 0.0
  %1252 = vmatprep.subr.mxu0 0.0
  %1253 = vmatpush1.msra.mxu0 0.0
  %1254 = vmatprep.subr.mxu0 0.0
  %1255 = vmatpush1.msra.mxu0 0.0
  %1256 = vmatprep.subr.mxu0 0.0
  %1257 = vmatpush1.msra.mxu0 0.0
  %1258 = vmatprep.subr.mxu0 0.0
  %1259 = vmatpush1.msra.mxu0 0.0
  %1260 = vmatprep.subr.mxu0 0.0
  %1261 = vmatpush1.msra.mxu0 0.0
  %1262 = vmatprep.subr.mxu0 0.0
  %1263 = vmatpush1.msra.mxu0 0.0
  %1264 = vmatprep.subr.mxu0 0.0
  %1265 = vmatpush1.msra.mxu0 0.0
  %1266 = vmatprep.subr.mxu0 0.0
  %1267 = vmatpush1.msra.mxu0 0.0
  %1268 = vmatprep.subr.mxu0 0.0
  %1269 = vmatpush1.msra.mxu0 0.0
  %1270 = vmatprep.subr.mxu0 0.0
  %1271 = vmatpush1.msra.mxu0 0.0
  %1272 = vmatprep.subr.mxu0 0.0
  %1273 = vmatpush1.msra.mxu0 0.0
  %1274 = vmatprep.subr.mxu0 0.0
  %1275 = vmatpush1.msra.mxu0 0.0
  %1276 = vmatprep.mubr.f32.mxu0 0.0
  %1277 = vmatmul.mubr.f32.gmra.mrb[0].mxu0 %v1210
  %v1278 = vpop.f32.mrb[0].mxu0
  %v1279 = vadd.f32 %v1172, %v1278
  %v1280 = vpop.f32.mrb[0].mxu0
  %v1281 = vadd.f32 %v1176, %v1280
  %1282 = vdwg.mxu0
  %1283 = vmatprep.subr.mxu0 %v1106
  %1284 = vmatpush1.msra.mxu0 %v1105
  %1285 = vmatprep.subr.mxu0 %v1114
  %1286 = vmatpush1.msra.mxu0 %v1113
  %1287 = vmatprep.subr.mxu0 %v1122
  %1288 = vmatpush1.msra.mxu0 %v1121
  %1289 = vmatprep.subr.mxu0 %v1130
  %1290 = vmatpush1.msra.mxu0 %v1129
  %1291 = vmatprep.subr.mxu0 %v1138
  %1292 = vmatpush1.msra.mxu0 %v1137
  %1293 = vmatprep.subr.mxu0 %v1146
  %1294 = vmatpush1.msra.mxu0 %v1145
  %1295 = vmatprep.subr.mxu0 %v1154
  %1296 = vmatpush1.msra.mxu0 %v1153
  %1297 = vmatprep.subr.mxu0 %v1162
  %1298 = vmatpush1.msra.mxu0 %v1161
  %1299 = vmatprep.subr.mxu0 0.0
  %1300 = vmatpush1.msra.mxu0 0.0
  %1301 = vmatprep.subr.mxu0 0.0
  %1302 = vmatpush1.msra.mxu0 0.0
  %1303 = vmatprep.subr.mxu0 0.0
  %1304 = vmatpush1.msra.mxu0 0.0
  %1305 = vmatprep.subr.mxu0 0.0
  %1306 = vmatpush1.msra.mxu0 0.0
  %1307 = vmatprep.subr.mxu0 0.0
  %1308 = vmatpush1.msra.mxu0 0.0
  %1309 = vmatprep.subr.mxu0 0.0
  %1310 = vmatpush1.msra.mxu0 0.0
  %1311 = vmatprep.subr.mxu0 0.0
  %1312 = vmatpush1.msra.mxu0 0.0
  %1313 = vmatprep.subr.mxu0 0.0
  %1314 = vmatpush1.msra.mxu0 0.0
  %1315 = vmatprep.subr.mxu0 0.0
  %1316 = vmatpush1.msra.mxu0 0.0
  %1317 = vmatprep.subr.mxu0 0.0
  %1318 = vmatpush1.msra.mxu0 0.0
  %1319 = vmatprep.subr.mxu0 0.0
  %1320 = vmatpush1.msra.mxu0 0.0
  %1321 = vmatprep.subr.mxu0 0.0
  %1322 = vmatpush1.msra.mxu0 0.0
  %1323 = vmatprep.subr.mxu0 0.0
  %1324 = vmatpush1.msra.mxu0 0.0
  %1325 = vmatprep.subr.mxu0 0.0
  %1326 = vmatpush1.msra.mxu0 0.0
  %1327 = vmatprep.subr.mxu0 0.0
  %1328 = vmatpush1.msra.mxu0 0.0
  %1329 = vmatprep.subr.mxu0 0.0
  %1330 = vmatpush1.msra.mxu0 0.0
  %1331 = vmatprep.subr.mxu0 0.0
  %1332 = vmatpush1.msra.mxu0 0.0
  %1333 = vmatprep.subr.mxu0 0.0
  %1334 = vmatpush1.msra.mxu0 0.0
  %1335 = vmatprep.subr.mxu0 0.0
  %1336 = vmatpush1.msra.mxu0 0.0
  %1337 = vmatprep.subr.mxu0 0.0
  %1338 = vmatpush1.msra.mxu0 0.0
  %1339 = vmatprep.subr.mxu0 0.0
  %1340 = vmatpush1.msra.mxu0 0.0
  %1341 = vmatprep.subr.mxu0 0.0
  %1342 = vmatpush1.msra.mxu0 0.0
  %1343 = vmatprep.subr.mxu0 0.0
  %1344 = vmatpush1.msra.mxu0 0.0
  %1345 = vmatprep.subr.mxu0 0.0
  %1346 = vmatpush1.msra.mxu0 0.0
  %1347 = vmatprep.mubr.f32.mxu0 0.0
  %1348 = vmatmul.mubr.f32.gmra.mrb[0].mxu0 %v1210
  %v1349 = vpop.f32.mrb[0].mxu0
  %v1350 = vadd.f32 %v1180, %v1349
  %v1351 = vpop.f32.mrb[0].mxu0
  %v1352 = vadd.f32 %v1184, %v1351
  %1353 = vdwg.mxu0
  %1354 = vmatprep.subr.mxu0 %v1108
  %1355 = vmatpush1.msra.mxu0 %v1107
  %1356 = vmatprep.subr.mxu0 %v1116
  %1357 = vmatpush1.msra.mxu0 %v1115
  %1358 = vmatprep.subr.mxu0 %v1124
  %1359 = vmatpush1.msra.mxu0 %v1123
  %1360 = vmatprep.subr.mxu0 %v1132
  %1361 = vmatpush1.msra.mxu0 %v1131
  %1362 = vmatprep.subr.mxu0 %v1140
  %1363 = vmatpush1.msra.mxu0 %v1139
  %1364 = vmatprep.subr.mxu0 %v1148
  %1365 = vmatpush1.msra.mxu0 %v1147
  %1366 = vmatprep.subr.mxu0 %v1156
  %1367 = vmatpush1.msra.mxu0 %v1155
  %1368 = vmatprep.subr.mxu0 %v1164
  %1369 = vmatpush1.msra.mxu0 %v1163
  %1370 = vmatprep.subr.mxu0 0.0
  %1371 = vmatpush1.msra.mxu0 0.0
  %1372 = vmatprep.subr.mxu0 0.0
  %1373 = vmatpush1.msra.mxu0 0.0
  %1374 = vmatprep.subr.mxu0 0.0
  %1375 = vmatpush1.msra.mxu0 0.0
  %1376 = vmatprep.subr.mxu0 0.0
  %1377 = vmatpush1.msra.mxu0 0.0
  %1378 = vmatprep.subr.mxu0 0.0
  %1379 = vmatpush1.msra.mxu0 0.0
  %1380 = vmatprep.subr.mxu0 0.0
  %1381 = vmatpush1.msra.mxu0 0.0
  %1382 = vmatprep.subr.mxu0 0.0
  %1383 = vmatpush1.msra.mxu0 0.0
  %1384 = vmatprep.subr.mxu0 0.0
  %1385 = vmatpush1.msra.mxu0 0.0
  %1386 = vmatprep.subr.mxu0 0.0
  %1387 = vmatpush1.msra.mxu0 0.0
  %1388 = vmatprep.subr.mxu0 0.0
  %1389 = vmatpush1.msra.mxu0 0.0
  %1390 = vmatprep.subr.mxu0 0.0
  %1391 = vmatpush1.msra.mxu0 0.0
  %1392 = vmatprep.subr.mxu0 0.0
  %1393 = vmatpush1.msra.mxu0 0.0
  %1394 = vmatprep.subr.mxu0 0.0
  %1395 = vmatpush1.msra.mxu0 0.0
  %1396 = vmatprep.subr.mxu0 0.0
  %1397 = vmatpush1.msra.mxu0 0.0
  %1398 = vmatprep.subr.mxu0 0.0
  %1399 = vmatpush1.msra.mxu0 0.0
  %1400 = vmatprep.subr.mxu0 0.0
  %1401 = vmatpush1.msra.mxu0 0.0
  %1402 = vmatprep.subr.mxu0 0.0
  %1403 = vmatpush1.msra.mxu0 0.0
  %1404 = vmatprep.subr.mxu0 0.0
  %1405 = vmatpush1.msra.mxu0 0.0
  %1406 = vmatprep.subr.mxu0 0.0
  %1407 = vmatpush1.msra.mxu0 0.0
  %1408 = vmatprep.subr.mxu0 0.0
  %1409 = vmatpush1.msra.mxu0 0.0
  %1410 = vmatprep.subr.mxu0 0.0
  %1411 = vmatpush1.msra.mxu0 0.0
  %1412 = vmatprep.subr.mxu0 0.0
  %1413 = vmatpush1.msra.mxu0 0.0
  %1414 = vmatprep.subr.mxu0 0.0
  %1415 = vmatpush1.msra.mxu0 0.0
  %1416 = vmatprep.subr.mxu0 0.0
  %1417 = vmatpush1.msra.mxu0 0.0
  %1418 = vmatprep.mubr.f32.mxu0 0.0
  %1419 = vmatmul.mubr.f32.gmra.mrb[0].mxu0 %v1210
  %v1420 = vpop.f32.mrb[0].mxu0
  %v1421 = vadd.f32 %v1188, %v1420
  %v1422 = vpop.f32.mrb[0].mxu0
  %v1423 = vadd.f32 %v1192, %v1422
  %1424 = vdwg.mxu0
  %1425 = vmatprep.subr.mxu0 %v1110
  %1426 = vmatpush1.msra.mxu0 %v1109
  %1427 = vmatprep.subr.mxu0 %v1118
  %1428 = vmatpush1.msra.mxu0 %v1117
  %1429 = vmatprep.subr.mxu0 %v1126
  %1430 = vmatpush1.msra.mxu0 %v1125
  %1431 = vmatprep.subr.mxu0 %v1134
  %1432 = vmatpush1.msra.mxu0 %v1133
  %1433 = vmatprep.subr.mxu0 %v1142
  %1434 = vmatpush1.msra.mxu0 %v1141
  %1435 = vmatprep.subr.mxu0 %v1150
  %1436 = vmatpush1.msra.mxu0 %v1149
  %1437 = vmatprep.subr.mxu0 %v1158
  %1438 = vmatpush1.msra.mxu0 %v1157
  %1439 = vmatprep.subr.mxu0 %v1166
  %1440 = vmatpush1.msra.mxu0 %v1165
  %1441 = vmatprep.subr.mxu0 0.0
  %1442 = vmatpush1.msra.mxu0 0.0
  %1443 = vmatprep.subr.mxu0 0.0
  %1444 = vmatpush1.msra.mxu0 0.0
  %1445 = vmatprep.subr.mxu0 0.0
  %1446 = vmatpush1.msra.mxu0 0.0
  %1447 = vmatprep.subr.mxu0 0.0
  %1448 = vmatpush1.msra.mxu0 0.0
  %1449 = vmatprep.subr.mxu0 0.0
  %1450 = vmatpush1.msra.mxu0 0.0
  %1451 = vmatprep.subr.mxu0 0.0
  %1452 = vmatpush1.msra.mxu0 0.0
  %1453 = vmatprep.subr.mxu0 0.0
  %1454 = vmatpush1.msra.mxu0 0.0
  %1455 = vmatprep.subr.mxu0 0.0
  %1456 = vmatpush1.msra.mxu0 0.0
  %1457 = vmatprep.subr.mxu0 0.0
  %1458 = vmatpush1.msra.mxu0 0.0
  %1459 = vmatprep.subr.mxu0 0.0
  %1460 = vmatpush1.msra.mxu0 0.0
  %1461 = vmatprep.subr.mxu0 0.0
  %1462 = vmatpush1.msra.mxu0 0.0
  %1463 = vmatprep.subr.mxu0 0.0
  %1464 = vmatpush1.msra.mxu0 0.0
  %1465 = vmatprep.subr.mxu0 0.0
  %1466 = vmatpush1.msra.mxu0 0.0
  %1467 = vmatprep.subr.mxu0 0.0
  %1468 = vmatpush1.msra.mxu0 0.0
  %1469 = vmatprep.subr.mxu0 0.0
  %1470 = vmatpush1.msra.mxu0 0.0
  %1471 = vmatprep.subr.mxu0 0.0
  %1472 = vmatpush1.msra.mxu0 0.0
  %1473 = vmatprep.subr.mxu0 0.0
  %1474 = vmatpush1.msra.mxu0 0.0
  %1475 = vmatprep.subr.mxu0 0.0
  %1476 = vmatpush1.msra.mxu0 0.0
  %1477 = vmatprep.subr.mxu0 0.0
  %1478 = vmatpush1.msra.mxu0 0.0
  %1479 = vmatprep.subr.mxu0 0.0
  %1480 = vmatpush1.msra.mxu0 0.0
  %1481 = vmatprep.subr.mxu0 0.0
  %1482 = vmatpush1.msra.mxu0 0.0
  %1483 = vmatprep.subr.mxu0 0.0
  %1484 = vmatpush1.msra.mxu0 0.0
  %1485 = vmatprep.subr.mxu0 0.0
  %1486 = vmatpush1.msra.mxu0 0.0
  %1487 = vmatprep.subr.mxu0 0.0
  %1488 = vmatpush1.msra.mxu0 0.0
  %1489 = vmatprep.mubr.f32.mxu0 0.0
  %1490 = vmatmul.mubr.f32.gmra.mrb[0].mxu0 %v1210
  %v1491 = vpop.f32.mrb[0].mxu0
  %v1492 = vadd.f32 %v1196, %v1491
  %v1493 = vpop.f32.mrb[0].mxu0
  %v1494 = vadd.f32 %v1200, %v1493
  %1495 = vdwg.mxu0
  %v1496 = vxor.u32 %v1279, 2147483648
  %v1497 = vxor.u32 %v1281, 2147483648
  %v1498 = vxor.u32 %v1350, 2147483648
  %v1499 = vxor.u32 %v1352, 2147483648
  %v1500 = vxor.u32 %v1421, 2147483648
  %v1501 = vxor.u32 %v1423, 2147483648
  %v1502 = vxor.u32 %v1492, 2147483648
  %v1503 = vxor.u32 %v1494, 2147483648
  %v1504 = vmul.f32 %v1496, 1.442695
  %v1505 = vpow.pop %v1504
  %v1506 = vmul.f32 %v1497, 1.442695
  %v1507 = vpow.pop %v1506
  %v1508 = vmul.f32 %v1498, 1.442695
  %v1509 = vpow.pop %v1508
  %v1510 = vmul.f32 %v1499, 1.442695
  %v1511 = vpow.pop %v1510
  %v1512 = vmul.f32 %v1500, 1.442695
  %v1513 = vpow.pop %v1512
  %v1514 = vmul.f32 %v1501, 1.442695
  %v1515 = vpow.pop %v1514
  %v1516 = vmul.f32 %v1502, 1.442695
  %v1517 = vpow.pop %v1516
  %v1518 = vmul.f32 %v1503, 1.442695
  %v1519 = vpow.pop %v1518
  %v1520 = vadd.f32 %v1505, 1.0
  %v1521 = vadd.f32 %v1507, 1.0
  %v1522 = vadd.f32 %v1509, 1.0
  %v1523 = vadd.f32 %v1511, 1.0
  %v1524 = vadd.f32 %v1513, 1.0
  %v1525 = vadd.f32 %v1515, 1.0
  %v1526 = vadd.f32 %v1517, 1.0
  %v1527 = vadd.f32 %v1519, 1.0
  %v1528 = vrcp.pop %v1520
  %v1529 = vmul.f32 1.0, %v1528
  %v1530 = vrcp.pop %v1521
  %v1531 = vmul.f32 1.0, %v1530
  %v1532 = vrcp.pop %v1522
  %v1533 = vmul.f32 1.0, %v1532
  %v1534 = vrcp.pop %v1523
  %v1535 = vmul.f32 1.0, %v1534
  %v1536 = vrcp.pop %v1524
  %v1537 = vmul.f32 1.0, %v1536
  %v1538 = vrcp.pop %v1525
  %v1539 = vmul.f32 1.0, %v1538
  %v1540 = vrcp.pop %v1526
  %v1541 = vmul.f32 1.0, %v1540
  %v1542 = vrcp.pop %v1527
  %v1543 = vmul.f32 1.0, %v1542
  %1544 = vst [vmem:[%s22] sm:$0xff] %v1529
  %1545 = vst [vmem:[%s22 + $0x8] sm:$0xff] %v1531
  %1546 = vst [vmem:[%s22 + $0x10] sm:$0xff] %v1533
  %1547 = vst [vmem:[%s22 + $0x18] sm:$0xff] %v1535
  %1548 = vst [vmem:[%s22 + $0x20] sm:$0xff] %v1537
  %1549 = vst [vmem:[%s22 + $0x28] sm:$0xff] %v1539
  %1550 = vst [vmem:[%s22 + $0x30] sm:$0xff] %v1541
  %1551 = vst [vmem:[%s22 + $0x38] sm:$0xff] %v1543
  %v1552 = vld [vmem:[%s18] sm:$0xff]
  %v1553 = vld [vmem:[%s18 + $0x8] sm:$0xff]
  %v1554 = vld [vmem:[%s19] sm:$0x1]
  %v1556 = vlaneseq
  %v1557 = vshrl.u32 %v1556, 7
  %v1558 = vsub.s32 0, %v1557
  %v1559 = vrot.slane %v1554, %v1558
  %1561 = vmatprep.subr.mxu0 0.0
  %1562 = vmatpush1.msra.mxu0 %v1552
  %1563 = vmatprep.subr.mxu0 0.0
  %1564 = vmatpush1.msra.mxu0 %v1553
  %1565 = vmatprep.subr.mxu0 0.0
  %1566 = vmatpush1.msra.mxu0 0.0
  %1567 = vmatprep.subr.mxu0 0.0
  %1568 = vmatpush1.msra.mxu0 0.0
  %1569 = vmatprep.subr.mxu0 0.0
  %1570 = vmatpush1.msra.mxu0 0.0
  %1571 = vmatprep.subr.mxu0 0.0
  %1572 = vmatpush1.msra.mxu0 0.0
  %1573 = vmatprep.subr.mxu0 0.0
  %1574 = vmatpush1.msra.mxu0 0.0
  %1575 = vmatprep.subr.mxu0 0.0
  %1576 = vmatpush1.msra.mxu0 0.0
  %1577 = vmatprep.subr.mxu0 0.0
  %1578 = vmatpush1.msra.mxu0 0.0
  %1579 = vmatprep.subr.mxu0 0.0
  %1580 = vmatpush1.msra.mxu0 0.0
  %1581 = vmatprep.subr.mxu0 0.0
  %1582 = vmatpush1.msra.mxu0 0.0
  %1583 = vmatprep.subr.mxu0 0.0
  %1584 = vmatpush1.msra.mxu0 0.0
  %1585 = vmatprep.subr.mxu0 0.0
  %1586 = vmatpush1.msra.mxu0 0.0
  %1587 = vmatprep.subr.mxu0 0.0
  %1588 = vmatpush1.msra.mxu0 0.0
  %1589 = vmatprep.subr.mxu0 0.0
  %1590 = vmatpush1.msra.mxu0 0.0
  %1591 = vmatprep.subr.mxu0 0.0
  %1592 = vmatpush1.msra.mxu0 0.0
  %1593 = vmatprep.subr.mxu0 0.0
  %1594 = vmatpush1.msra.mxu0 0.0
  %1595 = vmatprep.subr.mxu0 0.0
  %1596 = vmatpush1.msra.mxu0 0.0
  %1597 = vmatprep.subr.mxu0 0.0
  %1598 = vmatpush1.msra.mxu0 0.0
  %1599 = vmatprep.subr.mxu0 0.0
  %1600 = vmatpush1.msra.mxu0 0.0
  %1601 = vmatprep.subr.mxu0 0.0
  %1602 = vmatpush1.msra.mxu0 0.0
  %1603 = vmatprep.subr.mxu0 0.0
  %1604 = vmatpush1.msra.mxu0 0.0
  %1605 = vmatprep.subr.mxu0 0.0
  %1606 = vmatpush1.msra.mxu0 0.0
  %1607 = vmatprep.subr.mxu0 0.0
  %1608 = vmatpush1.msra.mxu0 0.0
  %1609 = vmatprep.subr.mxu0 0.0
  %1610 = vmatpush1.msra.mxu0 0.0
  %1611 = vmatprep.subr.mxu0 0.0
  %1612 = vmatpush1.msra.mxu0 0.0
  %1613 = vmatprep.subr.mxu0 0.0
  %1614 = vmatpush1.msra.mxu0 0.0
  %1615 = vmatprep.subr.mxu0 0.0
  %1616 = vmatpush1.msra.mxu0 0.0
  %1617 = vmatprep.subr.mxu0 0.0
  %1618 = vmatpush1.msra.mxu0 0.0
  %1619 = vmatprep.subr.mxu0 0.0
  %1620 = vmatpush1.msra.mxu0 0.0
  %1621 = vmatprep.subr.mxu0 0.0
  %1622 = vmatpush1.msra.mxu0 0.0
  %1623 = vmatprep.subr.mxu0 0.0
  %1624 = vmatpush1.msra.mxu0 0.0
  %1625 = vmatprep.mubr.f32.mxu0 0.0
  %1626 = vmatmul.mubr.f32.gmra.mrb[0].mxu0 %v1030
  %v1627 = vpop.f32.mrb[0].mxu0
  %v1628 = vadd.f32 %v1559, %v1627
  %v1629 = vpop.f32.mrb[0].mxu0
  %1630 = vdwg.mxu0
  %v1631 = vmax.f32 %v1628, 0.0
  %v1632 = vld [vmem:[%s20] sm:$0xff]
  %v1633 = vld [vmem:[%s20 + $0x8] sm:$0xff]
  %v1634 = vld [vmem:[%s20 + $0x10] sm:$0xff]
  %v1635 = vld [vmem:[%s20 + $0x18] sm:$0xff]
  %v1636 = vld [vmem:[%s20 + $0x20] sm:$0xff]
  %v1637 = vld [vmem:[%s20 + $0x28] sm:$0xff]
  %v1638 = vld [vmem:[%s20 + $0x30] sm:$0xff]
  %v1639 = vld [vmem:[%s20 + $0x38] sm:$0xff]
  %v1640 = vld [vmem:[%s21] sm:$0x1]
  %v1642 = vlaneseq
  %v1643 = vshrl.u32 %v1642, 7
  %v1644 = vsub.s32 0, %v1643
  %v1645 = vrot.slane %v1640, %v1644
  %v1648 = vsel %vm759, %v1631, 0
  %1650 = vmatprep.subr.mxu0 0.0
  %1651 = vmatpush1.msra.mxu0 %v1632
  %1652 = vmatprep.subr.mxu0 0.0
  %1653 = vmatpush1.msra.mxu0 %v1633
  %1654 = vmatprep.subr.mxu0 0.0
  %1655 = vmatpush1.msra.mxu0 %v1634
  %1656 = vmatprep.subr.mxu0 0.0
  %1657 = vmatpush1.msra.mxu0 %v1635
  %1658 = vmatprep.subr.mxu0 0.0
  %1659 = vmatpush1.msra.mxu0 %v1636
  %1660 = vmatprep.subr.mxu0 0.0
  %1661 = vmatpush1.msra.mxu0 %v1637
  %1662 = vmatprep.subr.mxu0 0.0
  %1663 = vmatpush1.msra.mxu0 %v1638
  %1664 = vmatprep.subr.mxu0 0.0
  %1665 = vmatpush1.msra.mxu0 %v1639
  %1666 = vmatprep.subr.mxu0 0.0
  %1667 = vmatpush1.msra.mxu0 0.0
  %1668 = vmatprep.subr.mxu0 0.0
  %1669 = vmatpush1.msra.mxu0 0.0
  %1670 = vmatprep.subr.mxu0 0.0
  %1671 = vmatpush1.msra.mxu0 0.0
  %1672 = vmatprep.subr.mxu0 0.0
  %1673 = vmatpush1.msra.mxu0 0.0
  %1674 = vmatprep.subr.mxu0 0.0
  %1675 = vmatpush1.msra.mxu0 0.0
  %1676 = vmatprep.subr.mxu0 0.0
  %1677 = vmatpush1.msra.mxu0 0.0
  %1678 = vmatprep.subr.mxu0 0.0
  %1679 = vmatpush1.msra.mxu0 0.0
  %1680 = vmatprep.subr.mxu0 0.0
  %1681 = vmatpush1.msra.mxu0 0.0
  %1682 = vmatprep.subr.mxu0 0.0
  %1683 = vmatpush1.msra.mxu0 0.0
  %1684 = vmatprep.subr.mxu0 0.0
  %1685 = vmatpush1.msra.mxu0 0.0
  %1686 = vmatprep.subr.mxu0 0.0
  %1687 = vmatpush1.msra.mxu0 0.0
  %1688 = vmatprep.subr.mxu0 0.0
  %1689 = vmatpush1.msra.mxu0 0.0
  %1690 = vmatprep.subr.mxu0 0.0
  %1691 = vmatpush1.msra.mxu0 0.0
  %1692 = vmatprep.subr.mxu0 0.0
  %1693 = vmatpush1.msra.mxu0 0.0
  %1694 = vmatprep.subr.mxu0 0.0
  %1695 = vmatpush1.msra.mxu0 0.0
  %1696 = vmatprep.subr.mxu0 0.0
  %1697 = vmatpush1.msra.mxu0 0.0
  %1698 = vmatprep.subr.mxu0 0.0
  %1699 = vmatpush1.msra.mxu0 0.0
  %1700 = vmatprep.subr.mxu0 0.0
  %1701 = vmatpush1.msra.mxu0 0.0
  %1702 = vmatprep.subr.mxu0 0.0
  %1703 = vmatpush1.msra.mxu0 0.0
  %1704 = vmatprep.subr.mxu0 0.0
  %1705 = vmatpush1.msra.mxu0 0.0
  %1706 = vmatprep.subr.mxu0 0.0
  %1707 = vmatpush1.msra.mxu0 0.0
  %1708 = vmatprep.subr.mxu0 0.0
  %1709 = vmatpush1.msra.mxu0 0.0
  %1710 = vmatprep.subr.mxu0 0.0
  %1711 = vmatpush1.msra.mxu0 0.0
  %1712 = vmatprep.subr.mxu0 0.0
  %1713 = vmatpush1.msra.mxu0 0.0
  %1714 = vmatprep.mubr.f32.mxu0 0.0
  %1715 = vmatmul.mubr.f32.gmra.mrb[0].mxu0 %v1648
  %v1716 = vpop.f32.mrb[0].mxu0
  %v1717 = vadd.f32 %v1645, %v1716
  %v1718 = vpop.f32.mrb[0].mxu0
  %1719 = vdwg.mxu0
  %1721 = vrot.lane.b32.xlu0 %v1012, 16
  %v1722 = vpop.permute.xlu0 %1721
  %1724 = vrot.lane.b32.xlu0 %v1019, 32
  %v1725 = vpop.permute.xlu0 %1724
  %1728 = vrot.lane.b32.xlu0 %v1717, 48
  %v1729 = vpop.permute.xlu0 %1728
  %1731 = vrot.lane.b32.xlu0 %v670, 80
  %v1732 = vpop.permute.xlu0 %1731
  %v1734 = vsel %vm504, %v927, %v1722
  %v1735 = vsel %vm685, %v1734, %v1725
  %vm1736 = vcmask 392192
  %v1737 = vsel %vm1736, %v1735, %v1729
  %vm1738 = vcmask 654336
  %v1739 = vsel %vm1738, %v1737, %v1732
  %vm1740 = vcmask 916480
  %v1741 = vsel %vm1740, %v1739, 0.0
  %1742 = vst [vmem:[%s23] sm:$0xff] %v1741
  // Predicated region
  $region90: #{lcmvae_forward.1} parent=0 // pred_check
    _
  $region91: #{lcmvae_forward.1} parent=0 // pred_check_branch
    %1744 = sbr.rel (0) target = $region93
  $region92: #{lcmvae_forward.1} parent=0 // pred_region
    _
  $region93: #{lcmvae_forward.1} parent=0 // pred_fallthru
    _
  // Predicated region
  $region94: #{lcmvae_forward.1} parent=0 // pred_check
    _
  $region95: #{lcmvae_forward.1} parent=0 // pred_check_branch
    %1746 = sbr.rel (0) target = $region97
  $region96: #{lcmvae_forward.1} parent=0 // pred_region
    _
  $region97: #{lcmvae_forward.1} parent=0 // pred_fallthru
    _
  // Predicated region
  $region98: #{lcmvae_forward.1} parent=0 // pred_check
    _
  $region99: #{lcmvae_forward.1} parent=0 // pred_check_branch
    %1748 = sbr.rel (0) target = $region101
  $region100: #{lcmvae_forward.1} parent=0 // pred_region
    _
  $region101: #{lcmvae_forward.1} parent=0 // pred_fallthru
    _
  // Predicated region
  $region102: #{lcmvae_forward.1} parent=0 // pred_check
    _
  $region103: #{lcmvae_forward.1} parent=0 // pred_check_branch
    %1750 = sbr.rel (0) target = $region105
  $region104: #{lcmvae_forward.1} parent=0 // pred_region
    _
  $region105: #{lcmvae_forward.1} parent=0 // pred_fallthru
    _

</llo_original>
